<compile_context>
chip_gen: v6e
topology: v6e:2x2x1
jax: 0.10.0
libtpu: 0.0.40
codegen_flags: <defaults>
</compile_context>

<pallas_src>
import jax
import jax.numpy as jnp
from jax.experimental import pallas as pl
from jax.experimental.pallas import tpu as pltpu

# Small, shape-consistent configuration (original module: model_dim=256, num_heads=8).
MODEL_DIM = 32
NUM_HEADS = 4
DIM_PER_HEAD = MODEL_DIM // NUM_HEADS
LN_EPS = 1e-5
B_TILE = 8          # batch rows per grid step (full sublane tile)


def _mha_fused_kernel(qres_ref, qt_ref, ke_ref, ve_ref, ge_ref, fe_ref,
                      gamma_ref, beta_ref, o_ref):
    Bt, dph, H = qt_ref.shape            # (8, 8, 4)
    LW = ke_ref.shape[-1]                # 128 = packed (head, key-position) lane axis
    blk = LW // H                        # 32  = key positions per head block (= model_dim)

    q_t = qt_ref[...]                    # (Bt, dph, H)   q_t[b,r,h]   = query[b, h*dph+r]
    ke = ke_ref[...]                     # (Bt, LW)       ke[b,h*blk+n] = key[b, h*dph+n//H]
    ve = ve_ref[...]                     # (Bt, LW)
    ge = ge_ref[...]                     # (H, LW)        ge[i,l] = scale * <wq_i, wk_{l%H}>
    fe = fe_ref[...]                     # (H, LW)        fe[i,l] =         <wf_i, wv_{l%H}>

    # ------------------------------------------------------------------
    # Lane-expand q (4 single-lane broadcasts + one concat; no MXU, no masks):
    #   qle[b, r, h*blk + n] = q_t[b, r, h]
    # ------------------------------------------------------------------
    qle = jnp.concatenate(
        [jnp.broadcast_to(q_t[:, :, h:h + 1], (Bt, dph, blk)) for h in range(H)],
        axis=-1)                                                      # (Bt, dph, LW)

    qk = qle * ke[:, None, :]                                         # (Bt, dph, LW)

    # Scores for query position m = r*H + i:  s_i[b, r, l] = qk * scale*G[i, l%H]
    s_list = [qk * ge[i:i + 1, :] for i in range(H)]                  # H x (Bt, dph, LW)

    # ------------------------------------------------------------------
    # Softmax over the query-position axis m = (r, i)  == torch Softmax(dim=2);
    # the denominator is per (b, head, key-position) == per (b, lane).
    # ------------------------------------------------------------------
    m_max = s_list[0].max(axis=1, keepdims=True)                      # (Bt, 1, LW)
    for si in s_list[1:]:
        m_max = jnp.maximum(m_max, si.max(axis=1, keepdims=True))
    es_list = [jnp.exp(si - m_max) for si in s_list]
    z_sum = es_list[0].sum(axis=1, keepdims=True)
    for ei in es_list[1:]:
        z_sum = z_sum + ei.sum(axis=1, keepdims=True)                 # (Bt, 1, LW)
    inv = pl.reciprocal(z_sum, approx=False)   # exact: test tolerance is 1e-4
    # attention dropout / output dropout: identity (eval mode)

    # ------------------------------------------------------------------
    # attention @ v with linear_final folded in (F[i, n%H]); the (inv * ve) factor is
    # i-invariant, so apply it once after the unrolled i-sum.
    # ------------------------------------------------------------------
    zz = es_list[0] * fe[0:1, :]
    for i in range(1, H):
        zz = zz + es_list[i] * fe[i:i + 1, :]                         # (Bt, dph, LW)
    zz = zz * (inv * ve[:, None, :])

    # out[b, h*dph + r] = sum_n zz[b, r, h*blk + n]  (contiguous 32-lane block sums)
    cols = [jnp.sum(zz[:, :, h * blk:(h + 1) * blk], axis=-1) for h in range(H)]
    out = jnp.concatenate(cols, axis=-1)                              # (Bt, MODEL_DIM)

    # ------------------------------------------------------------------
    # Residual + LayerNorm (torch defaults: eps=1e-5, elementwise affine).
    # ------------------------------------------------------------------
    x = qres_ref[...] + out
    mean = jnp.mean(x, axis=-1, keepdims=True)
    var = jnp.mean((x - mean) ** 2, axis=-1, keepdims=True)
    xn = (x - mean) * jax.lax.rsqrt(var + LN_EPS)
    o_ref[...] = (xn * gamma_ref[...] + beta_ref[...]).astype(o_ref.dtype)


def multi_head_attention(query, key, value, params, *, b_tile=B_TILE):
    """Fused MCAN MultiHeadAttention forward (eval mode), batch-gridded pallas_call."""
    B, M = query.shape
    H, dph = NUM_HEADS, DIM_PER_HEAD
    assert M == MODEL_DIM == H * dph
    LW = H * M                                    # packed (head, key-position) lane axis
    f32 = jnp.float32

    # torch parity: scale = (key.size(-1) // num_heads) ** -0.5 (integer floor division).
    # NOTE: raises / degenerates exactly like torch if num_heads > dim_per_head.
    scale = float((dph // H) ** (-0.5))

    # ---- weight-only constants hoisted out of the kernel ----
    wq_c = params["wq"].reshape(H, dph).astype(f32)
    wk_c = params["wk"].reshape(H, dph).astype(f32)
    wv_c = params["wv"].reshape(H, dph).astype(f32)
    wf_c = params["wf"].reshape(H, dph).astype(f32)
    g = wq_c @ wk_c.T                             # (H, H) per-head q/k weight Gram
    f = wf_c @ wv_c.T                             # (H, H) linear_final folded into v proj
    ge = (scale * jnp.tile(g, (1, M))).astype(f32)   # (H, LW): ge[i, l] = scale*G[i, l%H]
    fe = jnp.tile(f, (1, M)).astype(f32)             # (H, LW): fe[i, l] = F[i, l%H]

    # ---- batch padding to a full sublane tile ----
    Bp = pl.cdiv(B, b_tile) * b_tile
    pad = Bp - B
    qp = jnp.pad(query, ((0, pad), (0, 0))).astype(f32)
    kp = jnp.pad(key, ((0, pad), (0, 0))).astype(f32)
    vp = jnp.pad(value, ((0, pad), (0, 0))).astype(f32)

    # ---- lane-dense activation slabs (pure layout plumbing) ----
    #   q_t[b, r, h]      = query[b, h*dph + r]
    #   k_exp[b, h*M + n] = key[b, h*dph + n//H]   (element-repeat along lanes)
    q_t = qp.reshape(Bp, H, dph).transpose(0, 2, 1)                       # (Bp, dph, H)
    k_exp = jnp.repeat(kp.reshape(Bp, H, dph), H, axis=2).reshape(Bp, LW)
    v_exp = jnp.repeat(vp.reshape(Bp, H, dph), H, axis=2).reshape(Bp, LW)

    gamma = params["gamma"].reshape(1, M).astype(f32)
    beta = params["beta"].reshape(1, M).astype(f32)

    grid = (Bp // b_tile,)
    out = pl.pallas_call(
        _mha_fused_kernel,
        out_shape=jax.ShapeDtypeStruct((Bp, M), f32),
        grid=grid,
        in_specs=[
            pl.BlockSpec((b_tile, M), lambda b: (b, 0)),            # residual query
            pl.BlockSpec((b_tile, dph, H), lambda b: (b, 0, 0)),    # q_t
            pl.BlockSpec((b_tile, LW), lambda b: (b, 0)),           # k_exp (lane-dense)
            pl.BlockSpec((b_tile, LW), lambda b: (b, 0)),           # v_exp (lane-dense)
            pl.BlockSpec((H, LW), lambda b: (0, 0)),                # ge: weight const, resident
            pl.BlockSpec((H, LW), lambda b: (0, 0)),                # fe: weight const, resident
            pl.BlockSpec((1, M), lambda b: (0, 0)),                 # gamma
            pl.BlockSpec((1, M), lambda b: (0, 0)),                 # beta
        ],
        out_specs=pl.BlockSpec((b_tile, M), lambda b: (b, 0)),
        compiler_params=pltpu.CompilerParams(
            dimension_semantics=("parallel",)),                     # megacore / v7x 2nd TC
    )(qp, q_t, k_exp, v_exp, ge, fe, gamma, beta)

    return out[:B].astype(query.dtype)


# ----------------------------------------------------------------------------
# Pure-JAX reference (naive, mirrors the PyTorch module op-for-op) for validation.
# ----------------------------------------------------------------------------
def reference_forward(query, key, value, params):
    B, M = query.shape
    H, dph = NUM_HEADS, DIM_PER_HEAD
    residual = query
    qp = query[:, :, None] * params["wq"][None, :, :]
    kp = key[:, :, None] * params["wk"][None, :, :]
    vp = value[:, :, None] * params["wv"][None, :, :]
    q4 = qp.reshape(B, H, M, dph)
    k4 = kp.reshape(B, H, M, dph)
    v4 = vp.reshape(B, H, M, dph)
    scale = float((dph // H) ** (-0.5))
    attn = jnp.einsum("bhmd,bhnd->bhmn", q4, k4) * scale
    attn = jax.nn.softmax(attn, axis=2)          # torch Softmax(dim=2)
    ctx = jnp.einsum("bhmn,bhnd->bhmd", attn, v4)
    ctx2d = ctx.reshape(B, M, H * dph)
    out = jnp.einsum("bmd,d->bm", ctx2d, params["wf"][0])
    x = residual + out
    mean = x.mean(axis=-1, keepdims=True)
    var = ((x - mean) ** 2).mean(axis=-1, keepdims=True)
    xn = (x - mean) / jnp.sqrt(var + LN_EPS)
    return xn * params["gamma"][0] + params["beta"][0]


if __name__ == "__main__":
    root = jax.random.PRNGKey(0)
    kq, kk, kv, k1, k2, k3, k4, k5, k6 = jax.random.split(root, 9)

    B = 2
    query = jax.random.normal(kq, (B, MODEL_DIM), jnp.float32)
    key_in = jax.random.normal(kk, (B, MODEL_DIM), jnp.float32)
    value = jax.random.normal(kv, (B, MODEL_DIM), jnp.float32)

    # Synthetic parameters (shapes from the module's __init__):
    #   linear_{q,k,v}: Linear(1, model_dim, bias=False) -> stored flat as (1, model_dim)
    #   linear_final:   Linear(model_dim, 1, bias=False) -> stored flat as (1, model_dim)
    #   layer_norm:     gamma/beta (non-trivial values to exercise the affine path)
    params = {
        "wq": jax.random.normal(k1, (1, MODEL_DIM), jnp.float32) * 0.1,
        "wk": jax.random.normal(k2, (1, MODEL_DIM), jnp.float32) * 0.1,
        "wv": jax.random.normal(k3, (1, MODEL_DIM), jnp.float32) * 0.1,
        "wf": jax.random.normal(k4, (1, MODEL_DIM), jnp.float32) * 0.1,
        "gamma": 1.0 + 0.1 * jax.random.normal(k5, (1, MODEL_DIM), jnp.float32),
        "beta": 0.1 * jax.random.normal(k6, (1, MODEL_DIM), jnp.float32),
    }

    out = multi_head_attention(query, key_in, value, params)
    out = jax.block_until_ready(out)

    ref = reference_forward(query, key_in, value, params)
    assert out.shape == (B, MODEL_DIM), out.shape
    max_err = float(jnp.max(jnp.abs(out - ref)))
    assert jnp.allclose(out, ref, atol=1e-4, rtol=1e-4), (
        f"mismatch vs reference: max abs err {max_err}"
    )
    print("KERNEL_OK")
</pallas_src>

<mosaic_0001>
module attributes {stable_mosaic.version = 11 : i64} {
  func.func @_mha_fused_kernel(%arg0: i32, %arg1: memref<8x32xf32, #tpu.memory_space<vmem>>, %arg2: memref<8x8x4xf32, #tpu.memory_space<vmem>>, %arg3: memref<8x128xf32, #tpu.memory_space<vmem>>, %arg4: memref<8x128xf32, #tpu.memory_space<vmem>>, %arg5: memref<4x128xf32, #tpu.memory_space<vmem>>, %arg6: memref<4x128xf32, #tpu.memory_space<vmem>>, %arg7: memref<1x32xf32, #tpu.memory_space<vmem>>, %arg8: memref<1x32xf32, #tpu.memory_space<vmem>>, %arg9: memref<8x32xf32, #tpu.memory_space<vmem>>) attributes {dimension_semantics = [#tpu.dimension_semantics<parallel>], iteration_bounds = array<i64: 1>, scalar_prefetch = 0 : i64, scratch_operands = 0 : i64, tpu.core_type = #tpu.core_type<tc>, window_params = [{transform_indices = @transform_0, window_bounds = array<i64: 8, 32>}, {transform_indices = @transform_1, window_bounds = array<i64: 8, 8, 4>}, {transform_indices = @transform_2, window_bounds = array<i64: 8, 128>}, {transform_indices = @transform_3, window_bounds = array<i64: 8, 128>}, {pipeline_mode = #tpu.pipeline_mode<synchronous>, transform_indices = @transform_4, window_bounds = array<i64: 4, 128>}, {pipeline_mode = #tpu.pipeline_mode<synchronous>, transform_indices = @transform_5, window_bounds = array<i64: 4, 128>}, {pipeline_mode = #tpu.pipeline_mode<synchronous>, transform_indices = @transform_6, window_bounds = array<i64: 1, 32>}, {pipeline_mode = #tpu.pipeline_mode<synchronous>, transform_indices = @transform_7, window_bounds = array<i64: 1, 32>}, {transform_indices = @transform_8, window_bounds = array<i64: 8, 32>}]} {
    %c0 = arith.constant 0 : index
    %c0_0 = arith.constant 0 : index
    %c0_1 = arith.constant 0 : index
    %0 = vector.load %arg2[%c0, %c0_0, %c0_1] : memref<8x8x4xf32, #tpu.memory_space<vmem>>, vector<8x8x4xf32>
    %c0_2 = arith.constant 0 : index
    %c0_3 = arith.constant 0 : index
    %1 = vector.load %arg3[%c0_2, %c0_3] : memref<8x128xf32, #tpu.memory_space<vmem>>, vector<8x128xf32>
    %c0_4 = arith.constant 0 : index
    %c0_5 = arith.constant 0 : index
    %2 = vector.load %arg4[%c0_4, %c0_5] : memref<8x128xf32, #tpu.memory_space<vmem>>, vector<8x128xf32>
    %c0_6 = arith.constant 0 : index
    %c0_7 = arith.constant 0 : index
    %3 = vector.load %arg5[%c0_6, %c0_7] : memref<4x128xf32, #tpu.memory_space<vmem>>, vector<4x128xf32>
    %c0_8 = arith.constant 0 : index
    %c0_9 = arith.constant 0 : index
    %4 = vector.load %arg6[%c0_8, %c0_9] : memref<4x128xf32, #tpu.memory_space<vmem>>, vector<4x128xf32>
    %5 = vector.extract_strided_slice %0 {offsets = [0, 0, 0], sizes = [8, 8, 1], strides = [1, 1, 1]} : vector<8x8x4xf32> to vector<8x8x1xf32>
    %6 = vector.shape_cast %5 : vector<8x8x1xf32> to vector<8x8x1xf32>
    %7 = vector.broadcast %6 : vector<8x8x1xf32> to vector<8x8x32xf32>
    %8 = vector.extract_strided_slice %0 {offsets = [0, 0, 1], sizes = [8, 8, 1], strides = [1, 1, 1]} : vector<8x8x4xf32> to vector<8x8x1xf32>
    %9 = vector.shape_cast %8 : vector<8x8x1xf32> to vector<8x8x1xf32>
    %10 = vector.broadcast %9 : vector<8x8x1xf32> to vector<8x8x32xf32>
    %11 = vector.extract_strided_slice %0 {offsets = [0, 0, 2], sizes = [8, 8, 1], strides = [1, 1, 1]} : vector<8x8x4xf32> to vector<8x8x1xf32>
    %12 = vector.shape_cast %11 : vector<8x8x1xf32> to vector<8x8x1xf32>
    %13 = vector.broadcast %12 : vector<8x8x1xf32> to vector<8x8x32xf32>
    %14 = vector.extract_strided_slice %0 {offsets = [0, 0, 3], sizes = [8, 8, 1], strides = [1, 1, 1]} : vector<8x8x4xf32> to vector<8x8x1xf32>
    %15 = vector.shape_cast %14 : vector<8x8x1xf32> to vector<8x8x1xf32>
    %16 = vector.broadcast %15 : vector<8x8x1xf32> to vector<8x8x32xf32>
    %17 = tpu.concatenate %7, %10, %13, %16 in 2 : vector<8x8x32xf32>, vector<8x8x32xf32>, vector<8x8x32xf32>, vector<8x8x32xf32> -> vector<8x8x128xf32>
    %18 = vector.shape_cast %1 : vector<8x128xf32> to vector<8x1x128xf32>
    %19 = vector.broadcast %18 : vector<8x1x128xf32> to vector<8x8x128xf32>
    %20 = arith.mulf %17, %19 : vector<8x8x128xf32>
    %21 = vector.extract_strided_slice %3 {offsets = [0, 0], sizes = [1, 128], strides = [1, 1]} : vector<4x128xf32> to vector<1x128xf32>
    %22 = vector.shape_cast %21 : vector<1x128xf32> to vector<1x1x128xf32>
    %23 = vector.broadcast %22 : vector<1x1x128xf32> to vector<8x8x128xf32>
    %24 = arith.mulf %20, %23 : vector<8x8x128xf32>
    %25 = vector.extract_strided_slice %3 {offsets = [1, 0], sizes = [1, 128], strides = [1, 1]} : vector<4x128xf32> to vector<1x128xf32>
    %26 = vector.shape_cast %25 : vector<1x128xf32> to vector<1x1x128xf32>
    %27 = vector.broadcast %26 : vector<1x1x128xf32> to vector<8x8x128xf32>
    %28 = arith.mulf %20, %27 : vector<8x8x128xf32>
    %29 = vector.extract_strided_slice %3 {offsets = [2, 0], sizes = [1, 128], strides = [1, 1]} : vector<4x128xf32> to vector<1x128xf32>
    %30 = vector.shape_cast %29 : vector<1x128xf32> to vector<1x1x128xf32>
    %31 = vector.broadcast %30 : vector<1x1x128xf32> to vector<8x8x128xf32>
    %32 = arith.mulf %20, %31 : vector<8x8x128xf32>
    %33 = vector.extract_strided_slice %3 {offsets = [3, 0], sizes = [1, 128], strides = [1, 1]} : vector<4x128xf32> to vector<1x128xf32>
    %34 = vector.shape_cast %33 : vector<1x128xf32> to vector<1x1x128xf32>
    %35 = vector.broadcast %34 : vector<1x1x128xf32> to vector<8x8x128xf32>
    %36 = arith.mulf %20, %35 : vector<8x8x128xf32>
    %cst = arith.constant dense<0xFF800000> : vector<8x128xf32>
    %37 = vector.multi_reduction <maximumf>, %24, %cst [1] : vector<8x8x128xf32> to vector<8x128xf32>
    %38 = vector.shape_cast %37 : vector<8x128xf32> to vector<8x1x128xf32>
    %cst_10 = arith.constant dense<0xFF800000> : vector<8x128xf32>
    %39 = vector.multi_reduction <maximumf>, %28, %cst_10 [1] : vector<8x8x128xf32> to vector<8x128xf32>
    %40 = vector.shape_cast %39 : vector<8x128xf32> to vector<8x1x128xf32>
    %41 = arith.maximumf %38, %40 : vector<8x1x128xf32>
    %cst_11 = arith.constant dense<0xFF800000> : vector<8x128xf32>
    %42 = vector.multi_reduction <maximumf>, %32, %cst_11 [1] : vector<8x8x128xf32> to vector<8x128xf32>
    %43 = vector.shape_cast %42 : vector<8x128xf32> to vector<8x1x128xf32>
    %44 = arith.maximumf %41, %43 : vector<8x1x128xf32>
    %cst_12 = arith.constant dense<0xFF800000> : vector<8x128xf32>
    %45 = vector.multi_reduction <maximumf>, %36, %cst_12 [1] : vector<8x8x128xf32> to vector<8x128xf32>
    %46 = vector.shape_cast %45 : vector<8x128xf32> to vector<8x1x128xf32>
    %47 = arith.maximumf %44, %46 : vector<8x1x128xf32>
    %48 = vector.broadcast %47 : vector<8x1x128xf32> to vector<8x8x128xf32>
    %49 = arith.subf %24, %48 : vector<8x8x128xf32>
    %50 = math.exp %49 : vector<8x8x128xf32>
    %51 = vector.broadcast %47 : vector<8x1x128xf32> to vector<8x8x128xf32>
    %52 = arith.subf %28, %51 : vector<8x8x128xf32>
    %53 = math.exp %52 : vector<8x8x128xf32>
    %54 = vector.broadcast %47 : vector<8x1x128xf32> to vector<8x8x128xf32>
    %55 = arith.subf %32, %54 : vector<8x8x128xf32>
    %56 = math.exp %55 : vector<8x8x128xf32>
    %57 = vector.broadcast %47 : vector<8x1x128xf32> to vector<8x8x128xf32>
    %58 = arith.subf %36, %57 : vector<8x8x128xf32>
    %59 = math.exp %58 : vector<8x8x128xf32>
    %cst_13 = arith.constant dense<0.000000e+00> : vector<8x128xf32>
    %60 = vector.multi_reduction <add>, %50, %cst_13 [1] : vector<8x8x128xf32> to vector<8x128xf32>
    %61 = vector.shape_cast %60 : vector<8x128xf32> to vector<8x1x128xf32>
    %cst_14 = arith.constant dense<0.000000e+00> : vector<8x128xf32>
    %62 = vector.multi_reduction <add>, %53, %cst_14 [1] : vector<8x8x128xf32> to vector<8x128xf32>
    %63 = vector.shape_cast %62 : vector<8x128xf32> to vector<8x1x128xf32>
    %64 = arith.addf %61, %63 : vector<8x1x128xf32>
    %cst_15 = arith.constant dense<0.000000e+00> : vector<8x128xf32>
    %65 = vector.multi_reduction <add>, %56, %cst_15 [1] : vector<8x8x128xf32> to vector<8x128xf32>
    %66 = vector.shape_cast %65 : vector<8x128xf32> to vector<8x1x128xf32>
    %67 = arith.addf %64, %66 : vector<8x1x128xf32>
    %cst_16 = arith.constant dense<0.000000e+00> : vector<8x128xf32>
    %68 = vector.multi_reduction <add>, %59, %cst_16 [1] : vector<8x8x128xf32> to vector<8x128xf32>
    %69 = vector.shape_cast %68 : vector<8x128xf32> to vector<8x1x128xf32>
    %70 = arith.addf %67, %69 : vector<8x1x128xf32>
    %71 = tpu.reciprocal %70 : vector<8x1x128xf32> -> vector<8x1x128xf32>
    %72 = vector.extract_strided_slice %4 {offsets = [0, 0], sizes = [1, 128], strides = [1, 1]} : vector<4x128xf32> to vector<1x128xf32>
    %73 = vector.shape_cast %72 : vector<1x128xf32> to vector<1x1x128xf32>
    %74 = vector.broadcast %73 : vector<1x1x128xf32> to vector<8x8x128xf32>
    %75 = arith.mulf %50, %74 : vector<8x8x128xf32>
    %76 = vector.extract_strided_slice %4 {offsets = [1, 0], sizes = [1, 128], strides = [1, 1]} : vector<4x128xf32> to vector<1x128xf32>
    %77 = vector.shape_cast %76 : vector<1x128xf32> to vector<1x1x128xf32>
    %78 = vector.broadcast %77 : vector<1x1x128xf32> to vector<8x8x128xf32>
    %79 = arith.mulf %53, %78 : vector<8x8x128xf32>
    %80 = arith.addf %75, %79 : vector<8x8x128xf32>
    %81 = vector.extract_strided_slice %4 {offsets = [2, 0], sizes = [1, 128], strides = [1, 1]} : vector<4x128xf32> to vector<1x128xf32>
    %82 = vector.shape_cast %81 : vector<1x128xf32> to vector<1x1x128xf32>
    %83 = vector.broadcast %82 : vector<1x1x128xf32> to vector<8x8x128xf32>
    %84 = arith.mulf %56, %83 : vector<8x8x128xf32>
    %85 = arith.addf %80, %84 : vector<8x8x128xf32>
    %86 = vector.extract_strided_slice %4 {offsets = [3, 0], sizes = [1, 128], strides = [1, 1]} : vector<4x128xf32> to vector<1x128xf32>
    %87 = vector.shape_cast %86 : vector<1x128xf32> to vector<1x1x128xf32>
    %88 = vector.broadcast %87 : vector<1x1x128xf32> to vector<8x8x128xf32>
    %89 = arith.mulf %59, %88 : vector<8x8x128xf32>
    %90 = arith.addf %85, %89 : vector<8x8x128xf32>
    %91 = vector.shape_cast %2 : vector<8x128xf32> to vector<8x1x128xf32>
    %92 = arith.mulf %71, %91 : vector<8x1x128xf32>
    %93 = vector.broadcast %92 : vector<8x1x128xf32> to vector<8x8x128xf32>
    %94 = arith.mulf %90, %93 : vector<8x8x128xf32>
    %95 = vector.extract_strided_slice %94 {offsets = [0, 0, 0], sizes = [8, 8, 32], strides = [1, 1, 1]} : vector<8x8x128xf32> to vector<8x8x32xf32>
    %cst_17 = arith.constant dense<0.000000e+00> : vector<8x8xf32>
    %96 = vector.multi_reduction <add>, %95, %cst_17 [2] : vector<8x8x32xf32> to vector<8x8xf32>
    %97 = vector.extract_strided_slice %94 {offsets = [0, 0, 32], sizes = [8, 8, 32], strides = [1, 1, 1]} : vector<8x8x128xf32> to vector<8x8x32xf32>
    %cst_18 = arith.constant dense<0.000000e+00> : vector<8x8xf32>
    %98 = vector.multi_reduction <add>, %97, %cst_18 [2] : vector<8x8x32xf32> to vector<8x8xf32>
    %99 = vector.extract_strided_slice %94 {offsets = [0, 0, 64], sizes = [8, 8, 32], strides = [1, 1, 1]} : vector<8x8x128xf32> to vector<8x8x32xf32>
    %cst_19 = arith.constant dense<0.000000e+00> : vector<8x8xf32>
    %100 = vector.multi_reduction <add>, %99, %cst_19 [2] : vector<8x8x32xf32> to vector<8x8xf32>
    %101 = vector.extract_strided_slice %94 {offsets = [0, 0, 96], sizes = [8, 8, 32], strides = [1, 1, 1]} : vector<8x8x128xf32> to vector<8x8x32xf32>
    %cst_20 = arith.constant dense<0.000000e+00> : vector<8x8xf32>
    %102 = vector.multi_reduction <add>, %101, %cst_20 [2] : vector<8x8x32xf32> to vector<8x8xf32>
    %103 = tpu.concatenate %96, %98, %100, %102 in 1 : vector<8x8xf32>, vector<8x8xf32>, vector<8x8xf32>, vector<8x8xf32> -> vector<8x32xf32>
    %c0_21 = arith.constant 0 : index
    %c0_22 = arith.constant 0 : index
    %104 = vector.load %arg1[%c0_21, %c0_22] : memref<8x32xf32, #tpu.memory_space<vmem>>, vector<8x32xf32>
    %105 = arith.addf %104, %103 : vector<8x32xf32>
    %cst_23 = arith.constant dense<0.000000e+00> : vector<8xf32>
    %106 = vector.multi_reduction <add>, %105, %cst_23 [1] : vector<8x32xf32> to vector<8xf32>
    %107 = vector.shape_cast %106 : vector<8xf32> to vector<8x1xf32>
    %cst_24 = arith.constant 3.200000e+01 : f32
    %108 = vector.broadcast %cst_24 : f32 to vector<8x1xf32>
    %109 = arith.divf %107, %108 : vector<8x1xf32>
    %110 = vector.broadcast %109 : vector<8x1xf32> to vector<8x32xf32>
    %111 = arith.subf %105, %110 : vector<8x32xf32>
    %112 = arith.mulf %111, %111 : vector<8x32xf32>
    %cst_25 = arith.constant dense<0.000000e+00> : vector<8xf32>
    %113 = vector.multi_reduction <add>, %112, %cst_25 [1] : vector<8x32xf32> to vector<8xf32>
    %114 = vector.shape_cast %113 : vector<8xf32> to vector<8x1xf32>
    %cst_26 = arith.constant 3.200000e+01 : f32
    %115 = vector.broadcast %cst_26 : f32 to vector<8x1xf32>
    %116 = arith.divf %114, %115 : vector<8x1xf32>
    %117 = vector.broadcast %109 : vector<8x1xf32> to vector<8x32xf32>
    %118 = arith.subf %105, %117 : vector<8x32xf32>
    %cst_27 = arith.constant 9.99999974E-6 : f32
    %119 = vector.broadcast %cst_27 : f32 to vector<8x1xf32>
    %120 = arith.addf %116, %119 : vector<8x1xf32>
    %121 = math.rsqrt %120 : vector<8x1xf32>
    %122 = vector.broadcast %121 : vector<8x1xf32> to vector<8x32xf32>
    %123 = arith.mulf %118, %122 : vector<8x32xf32>
    %c0_28 = arith.constant 0 : index
    %c0_29 = arith.constant 0 : index
    %124 = vector.load %arg7[%c0_28, %c0_29] : memref<1x32xf32, #tpu.memory_space<vmem>>, vector<1x32xf32>
    %125 = vector.broadcast %124 : vector<1x32xf32> to vector<8x32xf32>
    %126 = arith.mulf %123, %125 : vector<8x32xf32>
    %c0_30 = arith.constant 0 : index
    %c0_31 = arith.constant 0 : index
    %127 = vector.load %arg8[%c0_30, %c0_31] : memref<1x32xf32, #tpu.memory_space<vmem>>, vector<1x32xf32>
    %128 = vector.broadcast %127 : vector<1x32xf32> to vector<8x32xf32>
    %129 = arith.addf %126, %128 : vector<8x32xf32>
    %c0_32 = arith.constant 0 : index
    %c0_33 = arith.constant 0 : index
    %130 = vector.load %arg9[%c0_32, %c0_33] : memref<8x32xf32, #tpu.memory_space<vmem>>, vector<8x32xf32>
    tpu.vector_store %arg9[%c0_32, %c0_33], %129 {strides = array<i32>} : memref<8x32xf32, #tpu.memory_space<vmem>>, vector<8x32xf32>,
    return
  }
  func.func @transform_0(%arg0: i32) -> (i32, i32) {
    %c0_i32 = arith.constant 0 : i32
    %c0_i32_0 = arith.constant 0 : i32
    return %arg0, %c0_i32 : i32, i32
  }
  func.func @transform_1(%arg0: i32) -> (i32, i32, i32) {
    %c0_i32 = arith.constant 0 : i32
    %c0_i32_0 = arith.constant 0 : i32
    %c0_i32_1 = arith.constant 0 : i32
    return %arg0, %c0_i32, %c0_i32_0 : i32, i32, i32
  }
  func.func @transform_2(%arg0: i32) -> (i32, i32) {
    %c0_i32 = arith.constant 0 : i32
    %c0_i32_0 = arith.constant 0 : i32
    return %arg0, %c0_i32 : i32, i32
  }
  func.func @transform_3(%arg0: i32) -> (i32, i32) {
    %c0_i32 = arith.constant 0 : i32
    %c0_i32_0 = arith.constant 0 : i32
    return %arg0, %c0_i32 : i32, i32
  }
  func.func @transform_4(%arg0: i32) -> (i32, i32) {
    %c0_i32 = arith.constant 0 : i32
    %c0_i32_0 = arith.constant 0 : i32
    %c0_i32_1 = arith.constant 0 : i32
    return %c0_i32, %c0_i32_0 : i32, i32
  }
  func.func @transform_5(%arg0: i32) -> (i32, i32) {
    %c0_i32 = arith.constant 0 : i32
    %c0_i32_0 = arith.constant 0 : i32
    %c0_i32_1 = arith.constant 0 : i32
    return %c0_i32, %c0_i32_0 : i32, i32
  }
  func.func @transform_6(%arg0: i32) -> (i32, i32) {
    %c0_i32 = arith.constant 0 : i32
    %c0_i32_0 = arith.constant 0 : i32
    %c0_i32_1 = arith.constant 0 : i32
    return %c0_i32, %c0_i32_0 : i32, i32
  }
  func.func @transform_7(%arg0: i32) -> (i32, i32) {
    %c0_i32 = arith.constant 0 : i32
    %c0_i32_0 = arith.constant 0 : i32
    %c0_i32_1 = arith.constant 0 : i32
    return %c0_i32, %c0_i32_0 : i32, i32
  }
  func.func @transform_8(%arg0: i32) -> (i32, i32) {
    %c0_i32 = arith.constant 0 : i32
    %c0_i32_0 = arith.constant 0 : i32
    return %arg0, %c0_i32 : i32, i32
  }
}

</mosaic_0001>

<llo_original>
// kernel: tpu_custom_call.1
$region0: #{tpu_custom_call.1}
  #allocation0 [shape = 'u32[]', space=smem, size = 0x4, offset = 0x4, fixed_abs, tag = 'smem constant byte address 0x4 - core index']
  #allocation1 [shape = 'u32[144,128]{1,0:T(1,128)}', space=vmem, size = 0x12000, scoped, tag = 'internal scratch']
  %s0 = inlined_call_operand.vmem [shape: f32[8,32], index: 0, kind: input, shape index: {}]
  %s1 = inlined_call_operand.vmem [shape: f32[8,8,4], index: 1, kind: input, shape index: {}]
  %s2 = inlined_call_operand.vmem [shape: f32[8,128], index: 2, kind: input, shape index: {}]
  %s3 = inlined_call_operand.vmem [shape: f32[8,128], index: 3, kind: input, shape index: {}]
  %s4 = inlined_call_operand.vmem [shape: f32[4,128], index: 4, kind: input, shape index: {}]
  %s5 = inlined_call_operand.vmem [shape: f32[4,128], index: 5, kind: input, shape index: {}]
  %s6 = inlined_call_operand.vmem [shape: f32[1,32], index: 6, kind: input, shape index: {}]
  %s7 = inlined_call_operand.vmem [shape: f32[1,32], index: 7, kind: input, shape index: {}]
  %s8 = inlined_call_operand.hbm [shape: f32[8,32], index: 8, kind: output, shape index: {}]
  %s9 = sld [smem:[#allocation0]]
  $region42: #{tpu_custom_call.1} parent=0
    _
  %s11 = ssub.s32 1, %s9
  %s12 = scalar_select 0, %s11, %s9
  $region1: #{tpu_custom_call.1} parent=0
    #allocation2 [shape = 'u8[4096]{0}', space=vmem, size = 0x1000, scoped, tag = 'output window, operand 0, single buffered']
    #allocation3 [shape = 's32[1]{0}', space=sflag, size = 0x4, scoped, tag = 'scoped memory for tpu_custom_call.1']
    %13 = vsyncpa [#allocation3], 0
    // Predicated region
    $region2: #{tpu_custom_call.1} parent=1 // pred_check
      _
    $region3: #{tpu_custom_call.1} parent=1 // pred_check_branch
      %15 = sbr.rel (0) target = $region5
    $region4: #{tpu_custom_call.1} parent=1 // pred_region
      _
    $region5: #{tpu_custom_call.1} parent=1 // pred_fallthru
      _
    // Predicated region
    $region6: #{tpu_custom_call.1} parent=1 // pred_check
      _
    $region7: #{tpu_custom_call.1} parent=1 // pred_check_branch
      %17 = sbr.rel (0) target = $region9
    $region8: #{tpu_custom_call.1} parent=1 // pred_region
      _
    $region9: #{tpu_custom_call.1} parent=1 // pred_fallthru
      _
    // Predicated region
    $region10: #{tpu_custom_call.1} parent=1 // pred_check
      _
    $region11: #{tpu_custom_call.1} parent=1 // pred_check_branch
      %19 = sbr.rel (0) target = $region13
    $region12: #{tpu_custom_call.1} parent=1 // pred_region
      _
    $region13: #{tpu_custom_call.1} parent=1 // pred_fallthru
      _
    // Predicated region
    $region14: #{tpu_custom_call.1} parent=1 // pred_check
      _
    $region15: #{tpu_custom_call.1} parent=1 // pred_check_branch
      %21 = sbr.rel (0) target = $region17
    $region16: #{tpu_custom_call.1} parent=1 // pred_region
      _
    $region17: #{tpu_custom_call.1} parent=1 // pred_fallthru
      _
    // Predicated region
    $region18: #{tpu_custom_call.1} parent=1 // pred_check
      _
    $region19: #{tpu_custom_call.1} parent=1 // pred_check_branch
      %23 = sbr.rel (0) target = $region21
    $region20: #{tpu_custom_call.1} parent=1 // pred_region
      _
    $region21: #{tpu_custom_call.1} parent=1 // pred_fallthru
      _
    // Predicated region
    $region22: #{tpu_custom_call.1} parent=1 // pred_check
      _
    $region23: #{tpu_custom_call.1} parent=1 // pred_check_branch
      %25 = sbr.rel (0) target = $region25
    $region24: #{tpu_custom_call.1} parent=1 // pred_region
      _
    $region25: #{tpu_custom_call.1} parent=1 // pred_fallthru
      _
    // Predicated region
    $region26: #{tpu_custom_call.1} parent=1 // pred_check
      _
    $region27: #{tpu_custom_call.1} parent=1 // pred_check_branch
      %27 = sbr.rel (0) target = $region29
    $region28: #{tpu_custom_call.1} parent=1 // pred_region
      _
    $region29: #{tpu_custom_call.1} parent=1 // pred_fallthru
      _
    // Predicated region
    $region30: #{tpu_custom_call.1} parent=1 // pred_check
      _
    $region31: #{tpu_custom_call.1} parent=1 // pred_check_branch
      %29 = sbr.rel (0) target = $region33
    $region32: #{tpu_custom_call.1} parent=1 // pred_region
      _
    $region33: #{tpu_custom_call.1} parent=1 // pred_fallthru
      _
    %v30 = vld [vmem:[%s1] sm:$0xff]
    %v31 = vld [vmem:[%s1 + $0x8] sm:$0xff]
    %v32 = vld [vmem:[%s1 + $0x10] sm:$0xff]
    %v33 = vld [vmem:[%s1 + $0x18] sm:$0xff]
    %v34 = vld [vmem:[%s1 + $0x20] sm:$0xff]
    %v35 = vld [vmem:[%s1 + $0x28] sm:$0xff]
    %v36 = vld [vmem:[%s1 + $0x30] sm:$0xff]
    %v37 = vld [vmem:[%s1 + $0x38] sm:$0xff]
    %v38 = vld [vmem:[%s2] sm:$0xff]
    %v39 = vld [vmem:[%s3] sm:$0xff]
    %v40 = vld [vmem:[%s4] sm:$0xf]
    %v41 = vld [vmem:[%s5] sm:$0xf]
    %43 = vset.pattern.permute.xlu0 0
    %44 = vperm.xlu0 %43, %v30
    %v45 = vpop.permute.xlu0 %44
    %48 = vset.pattern.permute.xlu0 0
    %49 = vperm.xlu0 %48, %v31
    %v50 = vpop.permute.xlu0 %49
    %53 = vset.pattern.permute.xlu0 0
    %54 = vperm.xlu0 %53, %v32
    %v55 = vpop.permute.xlu0 %54
    %58 = vset.pattern.permute.xlu0 0
    %59 = vperm.xlu0 %58, %v33
    %v60 = vpop.permute.xlu0 %59
    %63 = vset.pattern.permute.xlu0 0
    %64 = vperm.xlu0 %63, %v34
    %v65 = vpop.permute.xlu0 %64
    %68 = vset.pattern.permute.xlu0 0
    %69 = vperm.xlu0 %68, %v35
    %v70 = vpop.permute.xlu0 %69
    %73 = vset.pattern.permute.xlu0 0
    %74 = vperm.xlu0 %73, %v36
    %v75 = vpop.permute.xlu0 %74
    %78 = vset.pattern.permute.xlu0 0
    %79 = vperm.xlu0 %78, %v37
    %v80 = vpop.permute.xlu0 %79
    %82 = vset.pattern.permute.xlu0 1
    %83 = vperm.xlu0 %82, %v30
    %v84 = vpop.permute.xlu0 %83
    %86 = vset.pattern.permute.xlu0 1
    %87 = vperm.xlu0 %86, %v31
    %v88 = vpop.permute.xlu0 %87
    %90 = vset.pattern.permute.xlu0 1
    %91 = vperm.xlu0 %90, %v32
    %v92 = vpop.permute.xlu0 %91
    %94 = vset.pattern.permute.xlu0 1
    %95 = vperm.xlu0 %94, %v33
    %v96 = vpop.permute.xlu0 %95
    %98 = vset.pattern.permute.xlu0 1
    %99 = vperm.xlu0 %98, %v34
    %v100 = vpop.permute.xlu0 %99
    %102 = vset.pattern.permute.xlu0 1
    %103 = vperm.xlu0 %102, %v35
    %v104 = vpop.permute.xlu0 %103
    %106 = vset.pattern.permute.xlu0 1
    %107 = vperm.xlu0 %106, %v36
    %v108 = vpop.permute.xlu0 %107
    %110 = vset.pattern.permute.xlu0 1
    %111 = vperm.xlu0 %110, %v37
    %v112 = vpop.permute.xlu0 %111
    %114 = vset.pattern.permute.xlu0 2
    %115 = vperm.xlu0 %114, %v30
    %v116 = vpop.permute.xlu0 %115
    %118 = vset.pattern.permute.xlu0 2
    %119 = vperm.xlu0 %118, %v31
    %v120 = vpop.permute.xlu0 %119
    %122 = vset.pattern.permute.xlu0 2
    %123 = vperm.xlu0 %122, %v32
    %v124 = vpop.permute.xlu0 %123
    %126 = vset.pattern.permute.xlu0 2
    %127 = vperm.xlu0 %126, %v33
    %v128 = vpop.permute.xlu0 %127
    %130 = vset.pattern.permute.xlu0 2
    %131 = vperm.xlu0 %130, %v34
    %v132 = vpop.permute.xlu0 %131
    %134 = vset.pattern.permute.xlu0 2
    %135 = vperm.xlu0 %134, %v35
    %v136 = vpop.permute.xlu0 %135
    %138 = vset.pattern.permute.xlu0 2
    %139 = vperm.xlu0 %138, %v36
    %v140 = vpop.permute.xlu0 %139
    %142 = vset.pattern.permute.xlu0 2
    %143 = vperm.xlu0 %142, %v37
    %v144 = vpop.permute.xlu0 %143
    %146 = vset.pattern.permute.xlu0 3
    %147 = vperm.xlu0 %146, %v30
    %v148 = vpop.permute.xlu0 %147
    %150 = vset.pattern.permute.xlu0 3
    %151 = vperm.xlu0 %150, %v31
    %v152 = vpop.permute.xlu0 %151
    %154 = vset.pattern.permute.xlu0 3
    %155 = vperm.xlu0 %154, %v32
    %v156 = vpop.permute.xlu0 %155
    %158 = vset.pattern.permute.xlu0 3
    %159 = vperm.xlu0 %158, %v33
    %v160 = vpop.permute.xlu0 %159
    %162 = vset.pattern.permute.xlu0 3
    %163 = vperm.xlu0 %162, %v34
    %v164 = vpop.permute.xlu0 %163
    %166 = vset.pattern.permute.xlu0 3
    %167 = vperm.xlu0 %166, %v35
    %v168 = vpop.permute.xlu0 %167
    %170 = vset.pattern.permute.xlu0 3
    %171 = vperm.xlu0 %170, %v36
    %v172 = vpop.permute.xlu0 %171
    %174 = vset.pattern.permute.xlu0 3
    %175 = vperm.xlu0 %174, %v37
    %v176 = vpop.permute.xlu0 %175
    %vm178 = vcmask 261120
    %v179 = vsel %vm178, %v45, %v84
    %v180 = vsel %vm178, %v50, %v88
    %v181 = vsel %vm178, %v55, %v92
    %v182 = vsel %vm178, %v60, %v96
    %v183 = vsel %vm178, %v65, %v100
    %v184 = vsel %vm178, %v70, %v104
    %v185 = vsel %vm178, %v75, %v108
    %v186 = vsel %vm178, %v80, %v112
    %vm187 = vcmask 523264
    %v188 = vsel %vm187, %v179, %v116
    %v189 = vsel %vm187, %v180, %v120
    %v190 = vsel %vm187, %v181, %v124
    %v191 = vsel %vm187, %v182, %v128
    %v192 = vsel %vm187, %v183, %v132
    %v193 = vsel %vm187, %v184, %v136
    %v194 = vsel %vm187, %v185, %v140
    %v195 = vsel %vm187, %v186, %v144
    %vm196 = vcmask 785408
    %v197 = vsel %vm196, %v188, %v148
    %v198 = vsel %vm196, %v189, %v152
    %v199 = vsel %vm196, %v190, %v156
    %v200 = vsel %vm196, %v191, %v160
    %v201 = vsel %vm196, %v192, %v164
    %v202 = vsel %vm196, %v193, %v168
    %v203 = vsel %vm196, %v194, %v172
    %v204 = vsel %vm196, %v195, %v176
    %v206 = vcombine.high %v38, %v38
    %v208 = vunpack.c.l.s4 1966171168
    %v209 = vunpack.c.0.s8 %v208
    %v210 = vlaneseq
    %v211 = vshrl.u32 %v210, 7
    %v212 = vsub.s32 %v209, %v211
    %v213 = vrot.slane %v38, %v212
    %v215 = vunpack.c.l.s4 1966171168
    %v216 = vunpack.c.0.s8 %v215
    %v217 = vlaneseq
    %v218 = vshrl.u32 %v217, 7
    %v219 = vsub.s32 %v216, %v218
    %v220 = vrot.slane %v206, %v219
    %v221 = vcombine.high %v213, %v213
    %v222 = vcombine.high %v220, %v220
    %v224 = vunpack.c.l.s4 1966171168
    %v225 = vunpack.c.0.s8 %v224
    %v226 = vlaneseq
    %v227 = vshrl.u32 %v226, 7
    %v228 = vsub.s32 %v225, %v227
    %v229 = vrot.slane %v213, %v228
    %v231 = vunpack.c.l.s4 1966171168
    %v232 = vunpack.c.0.s8 %v231
    %v233 = vlaneseq
    %v234 = vshrl.u32 %v233, 7
    %v235 = vsub.s32 %v232, %v234
    %v236 = vrot.slane %v220, %v235
    %v238 = vunpack.c.l.s4 1966171168
    %v239 = vunpack.c.0.s8 %v238
    %v240 = vlaneseq
    %v241 = vshrl.u32 %v240, 7
    %v242 = vsub.s32 %v239, %v241
    %v243 = vrot.slane %v221, %v242
    %v245 = vunpack.c.l.s4 1966171168
    %v246 = vunpack.c.0.s8 %v245
    %v247 = vlaneseq
    %v248 = vshrl.u32 %v247, 7
    %v249 = vsub.s32 %v246, %v248
    %v250 = vrot.slane %v222, %v249
    %v251 = vcombine.high %v229, %v229
    %v252 = vcombine.high %v236, %v236
    %v253 = vcombine.high %v243, %v243
    %v254 = vcombine.high %v250, %v250
    %v255 = vlaneseq
    %v256 = vshrl.u32 %v255, 7
    %v257 = vsub.s32 0, %v256
    %v258 = vrot.slane %v229, %v257
    %v259 = vlaneseq
    %v260 = vshrl.u32 %v259, 7
    %v261 = vsub.s32 0, %v260
    %v262 = vrot.slane %v243, %v261
    %v263 = vlaneseq
    %v264 = vshrl.u32 %v263, 7
    %v265 = vsub.s32 0, %v264
    %v266 = vrot.slane %v251, %v265
    %v267 = vlaneseq
    %v268 = vshrl.u32 %v267, 7
    %v269 = vsub.s32 0, %v268
    %v270 = vrot.slane %v253, %v269
    %v271 = vlaneseq
    %v272 = vshrl.u32 %v271, 7
    %v273 = vsub.s32 0, %v272
    %v274 = vrot.slane %v236, %v273
    %v275 = vlaneseq
    %v276 = vshrl.u32 %v275, 7
    %v277 = vsub.s32 0, %v276
    %v278 = vrot.slane %v250, %v277
    %v279 = vlaneseq
    %v280 = vshrl.u32 %v279, 7
    %v281 = vsub.s32 0, %v280
    %v282 = vrot.slane %v252, %v281
    %v283 = vlaneseq
    %v284 = vshrl.u32 %v283, 7
    %v285 = vsub.s32 0, %v284
    %v286 = vrot.slane %v254, %v285
    %v295 = vmul.f32 %v197, %v258
    %v296 = vmul.f32 %v198, %v262
    %v297 = vmul.f32 %v199, %v266
    %v298 = vmul.f32 %v200, %v270
    %v299 = vmul.f32 %v201, %v274
    %v300 = vmul.f32 %v202, %v278
    %v301 = vmul.f32 %v203, %v282
    %v302 = vmul.f32 %v204, %v286
    %v303 = vlaneseq
    %v304 = vshrl.u32 %v303, 7
    %v305 = vsub.s32 0, %v304
    %v306 = vrot.slane %v40, %v305
    %v307 = vmul.f32 %v295, %v306
    %v308 = vmul.f32 %v296, %v306
    %v309 = vmul.f32 %v297, %v306
    %v310 = vmul.f32 %v298, %v306
    %v311 = vmul.f32 %v299, %v306
    %v312 = vmul.f32 %v300, %v306
    %v313 = vmul.f32 %v301, %v306
    %v314 = vmul.f32 %v302, %v306
    %v315 = vlaneseq
    %v316 = vshrl.u32 %v315, 7
    %v317 = vsub.s32 1, %v316
    %v318 = vrot.slane %v40, %v317
    %v319 = vmul.f32 %v295, %v318
    %v320 = vmul.f32 %v296, %v318
    %v321 = vmul.f32 %v297, %v318
    %v322 = vmul.f32 %v298, %v318
    %v323 = vmul.f32 %v299, %v318
    %v324 = vmul.f32 %v300, %v318
    %v325 = vmul.f32 %v301, %v318
    %v326 = vmul.f32 %v302, %v318
    %v327 = vlaneseq
    %v328 = vshrl.u32 %v327, 7
    %v329 = vsub.s32 2, %v328
    %v330 = vrot.slane %v40, %v329
    %v331 = vmul.f32 %v295, %v330
    %v332 = vmul.f32 %v296, %v330
    %v333 = vmul.f32 %v297, %v330
    %v334 = vmul.f32 %v298, %v330
    %v335 = vmul.f32 %v299, %v330
    %v336 = vmul.f32 %v300, %v330
    %v337 = vmul.f32 %v301, %v330
    %v338 = vmul.f32 %v302, %v330
    %v339 = vlaneseq
    %v340 = vshrl.u32 %v339, 7
    %v341 = vsub.s32 3, %v340
    %v342 = vrot.slane %v40, %v341
    %v343 = vmul.f32 %v295, %v342
    %v344 = vmul.f32 %v296, %v342
    %v345 = vmul.f32 %v297, %v342
    %v346 = vmul.f32 %v298, %v342
    %v347 = vmul.f32 %v299, %v342
    %v348 = vmul.f32 %v300, %v342
    %v349 = vmul.f32 %v301, %v342
    %v350 = vmul.f32 %v302, %v342
    %v351 = vrot.slane %v307, 4
    %v352 = vmax.f32 %v307, %v351
    %v353 = vrot.slane %v352, 2
    %v354 = vmax.f32 %v352, %v353
    %v355 = vrot.slane %v354, 1
    %v356 = vmax.f32 %v354, %v355
    %v357 = vrot.slane %v308, 4
    %v358 = vmax.f32 %v308, %v357
    %v359 = vrot.slane %v358, 2
    %v360 = vmax.f32 %v358, %v359
    %v361 = vrot.slane %v360, 1
    %v362 = vmax.f32 %v360, %v361
    %v363 = vrot.slane %v309, 4
    %v364 = vmax.f32 %v309, %v363
    %v365 = vrot.slane %v364, 2
    %v366 = vmax.f32 %v364, %v365
    %v367 = vrot.slane %v366, 1
    %v368 = vmax.f32 %v366, %v367
    %v369 = vrot.slane %v310, 4
    %v370 = vmax.f32 %v310, %v369
    %v371 = vrot.slane %v370, 2
    %v372 = vmax.f32 %v370, %v371
    %v373 = vrot.slane %v372, 1
    %v374 = vmax.f32 %v372, %v373
    %v375 = vrot.slane %v311, 4
    %v376 = vmax.f32 %v311, %v375
    %v377 = vrot.slane %v376, 2
    %v378 = vmax.f32 %v376, %v377
    %v379 = vrot.slane %v378, 1
    %v380 = vmax.f32 %v378, %v379
    %v381 = vrot.slane %v312, 4
    %v382 = vmax.f32 %v312, %v381
    %v383 = vrot.slane %v382, 2
    %v384 = vmax.f32 %v382, %v383
    %v385 = vrot.slane %v384, 1
    %v386 = vmax.f32 %v384, %v385
    %v387 = vrot.slane %v313, 4
    %v388 = vmax.f32 %v313, %v387
    %v389 = vrot.slane %v388, 2
    %v390 = vmax.f32 %v388, %v389
    %v391 = vrot.slane %v390, 1
    %v392 = vmax.f32 %v390, %v391
    %v393 = vrot.slane %v314, 4
    %v394 = vmax.f32 %v314, %v393
    %v395 = vrot.slane %v394, 2
    %v396 = vmax.f32 %v394, %v395
    %v397 = vrot.slane %v396, 1
    %v398 = vmax.f32 %v396, %v397
    %v399 = vrot.slane %v319, 4
    %v400 = vmax.f32 %v319, %v399
    %v401 = vrot.slane %v400, 2
    %v402 = vmax.f32 %v400, %v401
    %v403 = vrot.slane %v402, 1
    %v404 = vmax.f32 %v402, %v403
    %v405 = vrot.slane %v320, 4
    %v406 = vmax.f32 %v320, %v405
    %v407 = vrot.slane %v406, 2
    %v408 = vmax.f32 %v406, %v407
    %v409 = vrot.slane %v408, 1
    %v410 = vmax.f32 %v408, %v409
    %v411 = vrot.slane %v321, 4
    %v412 = vmax.f32 %v321, %v411
    %v413 = vrot.slane %v412, 2
    %v414 = vmax.f32 %v412, %v413
    %v415 = vrot.slane %v414, 1
    %v416 = vmax.f32 %v414, %v415
    %v417 = vrot.slane %v322, 4
    %v418 = vmax.f32 %v322, %v417
    %v419 = vrot.slane %v418, 2
    %v420 = vmax.f32 %v418, %v419
    %v421 = vrot.slane %v420, 1
    %v422 = vmax.f32 %v420, %v421
    %v423 = vrot.slane %v323, 4
    %v424 = vmax.f32 %v323, %v423
    %v425 = vrot.slane %v424, 2
    %v426 = vmax.f32 %v424, %v425
    %v427 = vrot.slane %v426, 1
    %v428 = vmax.f32 %v426, %v427
    %v429 = vrot.slane %v324, 4
    %v430 = vmax.f32 %v324, %v429
    %v431 = vrot.slane %v430, 2
    %v432 = vmax.f32 %v430, %v431
    %v433 = vrot.slane %v432, 1
    %v434 = vmax.f32 %v432, %v433
    %v435 = vrot.slane %v325, 4
    %v436 = vmax.f32 %v325, %v435
    %v437 = vrot.slane %v436, 2
    %v438 = vmax.f32 %v436, %v437
    %v439 = vrot.slane %v438, 1
    %v440 = vmax.f32 %v438, %v439
    %v441 = vrot.slane %v326, 4
    %v442 = vmax.f32 %v326, %v441
    %v443 = vrot.slane %v442, 2
    %v444 = vmax.f32 %v442, %v443
    %v445 = vrot.slane %v444, 1
    %v446 = vmax.f32 %v444, %v445
    %v447 = vmax.f32 %v356, %v404
    %v448 = vmax.f32 %v362, %v410
    %v449 = vmax.f32 %v368, %v416
    %v450 = vmax.f32 %v374, %v422
    %v451 = vmax.f32 %v380, %v428
    %v452 = vmax.f32 %v386, %v434
    %v453 = vmax.f32 %v392, %v440
    %v454 = vmax.f32 %v398, %v446
    %v455 = vrot.slane %v331, 4
    %v456 = vmax.f32 %v331, %v455
    %v457 = vrot.slane %v456, 2
    %v458 = vmax.f32 %v456, %v457
    %v459 = vrot.slane %v458, 1
    %v460 = vmax.f32 %v458, %v459
    %v461 = vrot.slane %v332, 4
    %v462 = vmax.f32 %v332, %v461
    %v463 = vrot.slane %v462, 2
    %v464 = vmax.f32 %v462, %v463
    %v465 = vrot.slane %v464, 1
    %v466 = vmax.f32 %v464, %v465
    %v467 = vrot.slane %v333, 4
    %v468 = vmax.f32 %v333, %v467
    %v469 = vrot.slane %v468, 2
    %v470 = vmax.f32 %v468, %v469
    %v471 = vrot.slane %v470, 1
    %v472 = vmax.f32 %v470, %v471
    %v473 = vrot.slane %v334, 4
    %v474 = vmax.f32 %v334, %v473
    %v475 = vrot.slane %v474, 2
    %v476 = vmax.f32 %v474, %v475
    %v477 = vrot.slane %v476, 1
    %v478 = vmax.f32 %v476, %v477
    %v479 = vrot.slane %v335, 4
    %v480 = vmax.f32 %v335, %v479
    %v481 = vrot.slane %v480, 2
    %v482 = vmax.f32 %v480, %v481
    %v483 = vrot.slane %v482, 1
    %v484 = vmax.f32 %v482, %v483
    %v485 = vrot.slane %v336, 4
    %v486 = vmax.f32 %v336, %v485
    %v487 = vrot.slane %v486, 2
    %v488 = vmax.f32 %v486, %v487
    %v489 = vrot.slane %v488, 1
    %v490 = vmax.f32 %v488, %v489
    %v491 = vrot.slane %v337, 4
    %v492 = vmax.f32 %v337, %v491
    %v493 = vrot.slane %v492, 2
    %v494 = vmax.f32 %v492, %v493
    %v495 = vrot.slane %v494, 1
    %v496 = vmax.f32 %v494, %v495
    %v497 = vrot.slane %v338, 4
    %v498 = vmax.f32 %v338, %v497
    %v499 = vrot.slane %v498, 2
    %v500 = vmax.f32 %v498, %v499
    %v501 = vrot.slane %v500, 1
    %v502 = vmax.f32 %v500, %v501
    %v503 = vmax.f32 %v447, %v460
    %v504 = vmax.f32 %v448, %v466
    %v505 = vmax.f32 %v449, %v472
    %v506 = vmax.f32 %v450, %v478
    %v507 = vmax.f32 %v451, %v484
    %v508 = vmax.f32 %v452, %v490
    %v509 = vmax.f32 %v453, %v496
    %v510 = vmax.f32 %v454, %v502
    %v511 = vrot.slane %v343, 4
    %v512 = vmax.f32 %v343, %v511
    %v513 = vrot.slane %v512, 2
    %v514 = vmax.f32 %v512, %v513
    %v515 = vrot.slane %v514, 1
    %v516 = vmax.f32 %v514, %v515
    %v517 = vrot.slane %v344, 4
    %v518 = vmax.f32 %v344, %v517
    %v519 = vrot.slane %v518, 2
    %v520 = vmax.f32 %v518, %v519
    %v521 = vrot.slane %v520, 1
    %v522 = vmax.f32 %v520, %v521
    %v523 = vrot.slane %v345, 4
    %v524 = vmax.f32 %v345, %v523
    %v525 = vrot.slane %v524, 2
    %v526 = vmax.f32 %v524, %v525
    %v527 = vrot.slane %v526, 1
    %v528 = vmax.f32 %v526, %v527
    %v529 = vrot.slane %v346, 4
    %v530 = vmax.f32 %v346, %v529
    %v531 = vrot.slane %v530, 2
    %v532 = vmax.f32 %v530, %v531
    %v533 = vrot.slane %v532, 1
    %v534 = vmax.f32 %v532, %v533
    %v535 = vrot.slane %v347, 4
    %v536 = vmax.f32 %v347, %v535
    %v537 = vrot.slane %v536, 2
    %v538 = vmax.f32 %v536, %v537
    %v539 = vrot.slane %v538, 1
    %v540 = vmax.f32 %v538, %v539
    %v541 = vrot.slane %v348, 4
    %v542 = vmax.f32 %v348, %v541
    %v543 = vrot.slane %v542, 2
    %v544 = vmax.f32 %v542, %v543
    %v545 = vrot.slane %v544, 1
    %v546 = vmax.f32 %v544, %v545
    %v547 = vrot.slane %v349, 4
    %v548 = vmax.f32 %v349, %v547
    %v549 = vrot.slane %v548, 2
    %v550 = vmax.f32 %v548, %v549
    %v551 = vrot.slane %v550, 1
    %v552 = vmax.f32 %v550, %v551
    %v553 = vrot.slane %v350, 4
    %v554 = vmax.f32 %v350, %v553
    %v555 = vrot.slane %v554, 2
    %v556 = vmax.f32 %v554, %v555
    %v557 = vrot.slane %v556, 1
    %v558 = vmax.f32 %v556, %v557
    %v559 = vmax.f32 %v503, %v516
    %v560 = vmax.f32 %v504, %v522
    %v561 = vmax.f32 %v505, %v528
    %v562 = vmax.f32 %v506, %v534
    %v563 = vmax.f32 %v507, %v540
    %v564 = vmax.f32 %v508, %v546
    %v565 = vmax.f32 %v509, %v552
    %v566 = vmax.f32 %v510, %v558
    %v567 = vsub.f32 %v307, %v559
    %v568 = vsub.f32 %v308, %v560
    %v569 = vsub.f32 %v309, %v561
    %v570 = vsub.f32 %v310, %v562
    %v571 = vsub.f32 %v311, %v563
    %v572 = vsub.f32 %v312, %v564
    %v573 = vsub.f32 %v313, %v565
    %v574 = vsub.f32 %v314, %v566
    %v575 = vmul.f32 %v567, 1.442695
    %v576 = vpow.pop %v575
    %v577 = vmul.f32 %v568, 1.442695
    %v578 = vpow.pop %v577
    %v579 = vmul.f32 %v569, 1.442695
    %v580 = vpow.pop %v579
    %v581 = vmul.f32 %v570, 1.442695
    %v582 = vpow.pop %v581
    %v583 = vmul.f32 %v571, 1.442695
    %v584 = vpow.pop %v583
    %v585 = vmul.f32 %v572, 1.442695
    %v586 = vpow.pop %v585
    %v587 = vmul.f32 %v573, 1.442695
    %v588 = vpow.pop %v587
    %v589 = vmul.f32 %v574, 1.442695
    %v590 = vpow.pop %v589
    %v591 = vsub.f32 %v319, %v559
    %v592 = vsub.f32 %v320, %v560
    %v593 = vsub.f32 %v321, %v561
    %v594 = vsub.f32 %v322, %v562
    %v595 = vsub.f32 %v323, %v563
    %v596 = vsub.f32 %v324, %v564
    %v597 = vsub.f32 %v325, %v565
    %v598 = vsub.f32 %v326, %v566
    %v599 = vmul.f32 %v591, 1.442695
    %v600 = vpow.pop %v599
    %v601 = vmul.f32 %v592, 1.442695
    %v602 = vpow.pop %v601
    %v603 = vmul.f32 %v593, 1.442695
    %v604 = vpow.pop %v603
    %v605 = vmul.f32 %v594, 1.442695
    %v606 = vpow.pop %v605
    %v607 = vmul.f32 %v595, 1.442695
    %v608 = vpow.pop %v607
    %v609 = vmul.f32 %v596, 1.442695
    %v610 = vpow.pop %v609
    %v611 = vmul.f32 %v597, 1.442695
    %v612 = vpow.pop %v611
    %v613 = vmul.f32 %v598, 1.442695
    %v614 = vpow.pop %v613
    %v615 = vsub.f32 %v331, %v559
    %v616 = vsub.f32 %v332, %v560
    %v617 = vsub.f32 %v333, %v561
    %v618 = vsub.f32 %v334, %v562
    %v619 = vsub.f32 %v335, %v563
    %v620 = vsub.f32 %v336, %v564
    %v621 = vsub.f32 %v337, %v565
    %v622 = vsub.f32 %v338, %v566
    %v623 = vmul.f32 %v615, 1.442695
    %v624 = vpow.pop %v623
    %v625 = vmul.f32 %v616, 1.442695
    %v626 = vpow.pop %v625
    %v627 = vmul.f32 %v617, 1.442695
    %v628 = vpow.pop %v627
    %v629 = vmul.f32 %v618, 1.442695
    %v630 = vpow.pop %v629
    %v631 = vmul.f32 %v619, 1.442695
    %v632 = vpow.pop %v631
    %v633 = vmul.f32 %v620, 1.442695
    %v634 = vpow.pop %v633
    %v635 = vmul.f32 %v621, 1.442695
    %v636 = vpow.pop %v635
    %v637 = vmul.f32 %v622, 1.442695
    %v638 = vpow.pop %v637
    %v639 = vsub.f32 %v343, %v559
    %v640 = vsub.f32 %v344, %v560
    %v641 = vsub.f32 %v345, %v561
    %v642 = vsub.f32 %v346, %v562
    %v643 = vsub.f32 %v347, %v563
    %v644 = vsub.f32 %v348, %v564
    %v645 = vsub.f32 %v349, %v565
    %v646 = vsub.f32 %v350, %v566
    %v647 = vmul.f32 %v639, 1.442695
    %v648 = vpow.pop %v647
    %v649 = vmul.f32 %v640, 1.442695
    %v650 = vpow.pop %v649
    %v651 = vmul.f32 %v641, 1.442695
    %v652 = vpow.pop %v651
    %v653 = vmul.f32 %v642, 1.442695
    %v654 = vpow.pop %v653
    %v655 = vmul.f32 %v643, 1.442695
    %v656 = vpow.pop %v655
    %v657 = vmul.f32 %v644, 1.442695
    %v658 = vpow.pop %v657
    %v659 = vmul.f32 %v645, 1.442695
    %v660 = vpow.pop %v659
    %v661 = vmul.f32 %v646, 1.442695
    %v662 = vpow.pop %v661
    %v663 = vrot.slane %v576, 4
    %v664 = vadd.f32 %v576, %v663
    %v665 = vrot.slane %v664, 2
    %v666 = vadd.f32 %v664, %v665
    %v667 = vrot.slane %v666, 1
    %v668 = vadd.f32 %v666, %v667
    %v669 = vrot.slane %v578, 4
    %v670 = vadd.f32 %v578, %v669
    %v671 = vrot.slane %v670, 2
    %v672 = vadd.f32 %v670, %v671
    %v673 = vrot.slane %v672, 1
    %v674 = vadd.f32 %v672, %v673
    %v675 = vrot.slane %v580, 4
    %v676 = vadd.f32 %v580, %v675
    %v677 = vrot.slane %v676, 2
    %v678 = vadd.f32 %v676, %v677
    %v679 = vrot.slane %v678, 1
    %v680 = vadd.f32 %v678, %v679
    %v681 = vrot.slane %v582, 4
    %v682 = vadd.f32 %v582, %v681
    %v683 = vrot.slane %v682, 2
    %v684 = vadd.f32 %v682, %v683
    %v685 = vrot.slane %v684, 1
    %v686 = vadd.f32 %v684, %v685
    %v687 = vrot.slane %v584, 4
    %v688 = vadd.f32 %v584, %v687
    %v689 = vrot.slane %v688, 2
    %v690 = vadd.f32 %v688, %v689
    %v691 = vrot.slane %v690, 1
    %v692 = vadd.f32 %v690, %v691
    %v693 = vrot.slane %v586, 4
    %v694 = vadd.f32 %v586, %v693
    %v695 = vrot.slane %v694, 2
    %v696 = vadd.f32 %v694, %v695
    %v697 = vrot.slane %v696, 1
    %v698 = vadd.f32 %v696, %v697
    %v699 = vrot.slane %v588, 4
    %v700 = vadd.f32 %v588, %v699
    %v701 = vrot.slane %v700, 2
    %v702 = vadd.f32 %v700, %v701
    %v703 = vrot.slane %v702, 1
    %v704 = vadd.f32 %v702, %v703
    %v705 = vrot.slane %v590, 4
    %v706 = vadd.f32 %v590, %v705
    %v707 = vrot.slane %v706, 2
    %v708 = vadd.f32 %v706, %v707
    %v709 = vrot.slane %v708, 1
    %v710 = vadd.f32 %v708, %v709
    %v711 = vrot.slane %v600, 4
    %v712 = vadd.f32 %v600, %v711
    %v713 = vrot.slane %v712, 2
    %v714 = vadd.f32 %v712, %v713
    %v715 = vrot.slane %v714, 1
    %v716 = vadd.f32 %v714, %v715
    %v717 = vrot.slane %v602, 4
    %v718 = vadd.f32 %v602, %v717
    %v719 = vrot.slane %v718, 2
    %v720 = vadd.f32 %v718, %v719
    %v721 = vrot.slane %v720, 1
    %v722 = vadd.f32 %v720, %v721
    %v723 = vrot.slane %v604, 4
    %v724 = vadd.f32 %v604, %v723
    %v725 = vrot.slane %v724, 2
    %v726 = vadd.f32 %v724, %v725
    %v727 = vrot.slane %v726, 1
    %v728 = vadd.f32 %v726, %v727
    %v729 = vrot.slane %v606, 4
    %v730 = vadd.f32 %v606, %v729
    %v731 = vrot.slane %v730, 2
    %v732 = vadd.f32 %v730, %v731
    %v733 = vrot.slane %v732, 1
    %v734 = vadd.f32 %v732, %v733
    %v735 = vrot.slane %v608, 4
    %v736 = vadd.f32 %v608, %v735
    %v737 = vrot.slane %v736, 2
    %v738 = vadd.f32 %v736, %v737
    %v739 = vrot.slane %v738, 1
    %v740 = vadd.f32 %v738, %v739
    %v741 = vrot.slane %v610, 4
    %v742 = vadd.f32 %v610, %v741
    %v743 = vrot.slane %v742, 2
    %v744 = vadd.f32 %v742, %v743
    %v745 = vrot.slane %v744, 1
    %v746 = vadd.f32 %v744, %v745
    %v747 = vrot.slane %v612, 4
    %v748 = vadd.f32 %v612, %v747
    %v749 = vrot.slane %v748, 2
    %v750 = vadd.f32 %v748, %v749
    %v751 = vrot.slane %v750, 1
    %v752 = vadd.f32 %v750, %v751
    %v753 = vrot.slane %v614, 4
    %v754 = vadd.f32 %v614, %v753
    %v755 = vrot.slane %v754, 2
    %v756 = vadd.f32 %v754, %v755
    %v757 = vrot.slane %v756, 1
    %v758 = vadd.f32 %v756, %v757
    %v759 = vadd.f32 %v668, %v716
    %v760 = vadd.f32 %v674, %v722
    %v761 = vadd.f32 %v680, %v728
    %v762 = vadd.f32 %v686, %v734
    %v763 = vadd.f32 %v692, %v740
    %v764 = vadd.f32 %v698, %v746
    %v765 = vadd.f32 %v704, %v752
    %v766 = vadd.f32 %v710, %v758
    %v767 = vrot.slane %v624, 4
    %v768 = vadd.f32 %v624, %v767
    %v769 = vrot.slane %v768, 2
    %v770 = vadd.f32 %v768, %v769
    %v771 = vrot.slane %v770, 1
    %v772 = vadd.f32 %v770, %v771
    %v773 = vrot.slane %v626, 4
    %v774 = vadd.f32 %v626, %v773
    %v775 = vrot.slane %v774, 2
    %v776 = vadd.f32 %v774, %v775
    %v777 = vrot.slane %v776, 1
    %v778 = vadd.f32 %v776, %v777
    %v779 = vrot.slane %v628, 4
    %v780 = vadd.f32 %v628, %v779
    %v781 = vrot.slane %v780, 2
    %v782 = vadd.f32 %v780, %v781
    %v783 = vrot.slane %v782, 1
    %v784 = vadd.f32 %v782, %v783
    %v785 = vrot.slane %v630, 4
    %v786 = vadd.f32 %v630, %v785
    %v787 = vrot.slane %v786, 2
    %v788 = vadd.f32 %v786, %v787
    %v789 = vrot.slane %v788, 1
    %v790 = vadd.f32 %v788, %v789
    %v791 = vrot.slane %v632, 4
    %v792 = vadd.f32 %v632, %v791
    %v793 = vrot.slane %v792, 2
    %v794 = vadd.f32 %v792, %v793
    %v795 = vrot.slane %v794, 1
    %v796 = vadd.f32 %v794, %v795
    %v797 = vrot.slane %v634, 4
    %v798 = vadd.f32 %v634, %v797
    %v799 = vrot.slane %v798, 2
    %v800 = vadd.f32 %v798, %v799
    %v801 = vrot.slane %v800, 1
    %v802 = vadd.f32 %v800, %v801
    %v803 = vrot.slane %v636, 4
    %v804 = vadd.f32 %v636, %v803
    %v805 = vrot.slane %v804, 2
    %v806 = vadd.f32 %v804, %v805
    %v807 = vrot.slane %v806, 1
    %v808 = vadd.f32 %v806, %v807
    %v809 = vrot.slane %v638, 4
    %v810 = vadd.f32 %v638, %v809
    %v811 = vrot.slane %v810, 2
    %v812 = vadd.f32 %v810, %v811
    %v813 = vrot.slane %v812, 1
    %v814 = vadd.f32 %v812, %v813
    %v815 = vadd.f32 %v759, %v772
    %v816 = vadd.f32 %v760, %v778
    %v817 = vadd.f32 %v761, %v784
    %v818 = vadd.f32 %v762, %v790
    %v819 = vadd.f32 %v763, %v796
    %v820 = vadd.f32 %v764, %v802
    %v821 = vadd.f32 %v765, %v808
    %v822 = vadd.f32 %v766, %v814
    %v823 = vrot.slane %v648, 4
    %v824 = vadd.f32 %v648, %v823
    %v825 = vrot.slane %v824, 2
    %v826 = vadd.f32 %v824, %v825
    %v827 = vrot.slane %v826, 1
    %v828 = vadd.f32 %v826, %v827
    %v829 = vrot.slane %v650, 4
    %v830 = vadd.f32 %v650, %v829
    %v831 = vrot.slane %v830, 2
    %v832 = vadd.f32 %v830, %v831
    %v833 = vrot.slane %v832, 1
    %v834 = vadd.f32 %v832, %v833
    %v835 = vrot.slane %v652, 4
    %v836 = vadd.f32 %v652, %v835
    %v837 = vrot.slane %v836, 2
    %v838 = vadd.f32 %v836, %v837
    %v839 = vrot.slane %v838, 1
    %v840 = vadd.f32 %v838, %v839
    %v841 = vrot.slane %v654, 4
    %v842 = vadd.f32 %v654, %v841
    %v843 = vrot.slane %v842, 2
    %v844 = vadd.f32 %v842, %v843
    %v845 = vrot.slane %v844, 1
    %v846 = vadd.f32 %v844, %v845
    %v847 = vrot.slane %v656, 4
    %v848 = vadd.f32 %v656, %v847
    %v849 = vrot.slane %v848, 2
    %v850 = vadd.f32 %v848, %v849
    %v851 = vrot.slane %v850, 1
    %v852 = vadd.f32 %v850, %v851
    %v853 = vrot.slane %v658, 4
    %v854 = vadd.f32 %v658, %v853
    %v855 = vrot.slane %v854, 2
    %v856 = vadd.f32 %v854, %v855
    %v857 = vrot.slane %v856, 1
    %v858 = vadd.f32 %v856, %v857
    %v859 = vrot.slane %v660, 4
    %v860 = vadd.f32 %v660, %v859
    %v861 = vrot.slane %v860, 2
    %v862 = vadd.f32 %v860, %v861
    %v863 = vrot.slane %v862, 1
    %v864 = vadd.f32 %v862, %v863
    %v865 = vrot.slane %v662, 4
    %v866 = vadd.f32 %v662, %v865
    %v867 = vrot.slane %v866, 2
    %v868 = vadd.f32 %v866, %v867
    %v869 = vrot.slane %v868, 1
    %v870 = vadd.f32 %v868, %v869
    %v871 = vadd.f32 %v815, %v828
    %v872 = vadd.f32 %v816, %v834
    %v873 = vadd.f32 %v817, %v840
    %v874 = vadd.f32 %v818, %v846
    %v875 = vadd.f32 %v819, %v852
    %v876 = vadd.f32 %v820, %v858
    %v877 = vadd.f32 %v821, %v864
    %v878 = vadd.f32 %v822, %v870
    %v879 = vrcp.pop %v871
    %v880 = vrcp.pop %v872
    %v881 = vrcp.pop %v873
    %v882 = vrcp.pop %v874
    %v883 = vrcp.pop %v875
    %v884 = vrcp.pop %v876
    %v885 = vrcp.pop %v877
    %v886 = vrcp.pop %v878
    %v887 = vlaneseq
    %v888 = vshrl.u32 %v887, 7
    %v889 = vsub.s32 0, %v888
    %v890 = vrot.slane %v41, %v889
    %v891 = vmul.f32 %v576, %v890
    %v892 = vmul.f32 %v578, %v890
    %v893 = vmul.f32 %v580, %v890
    %v894 = vmul.f32 %v582, %v890
    %v895 = vmul.f32 %v584, %v890
    %v896 = vmul.f32 %v586, %v890
    %v897 = vmul.f32 %v588, %v890
    %v898 = vmul.f32 %v590, %v890
    %v899 = vlaneseq
    %v900 = vshrl.u32 %v899, 7
    %v901 = vsub.s32 1, %v900
    %v902 = vrot.slane %v41, %v901
    %v903 = vmul.f32 %v600, %v902
    %v904 = vmul.f32 %v602, %v902
    %v905 = vmul.f32 %v604, %v902
    %v906 = vmul.f32 %v606, %v902
    %v907 = vmul.f32 %v608, %v902
    %v908 = vmul.f32 %v610, %v902
    %v909 = vmul.f32 %v612, %v902
    %v910 = vmul.f32 %v614, %v902
    %v911 = vadd.f32 %v891, %v903
    %v912 = vadd.f32 %v892, %v904
    %v913 = vadd.f32 %v893, %v905
    %v914 = vadd.f32 %v894, %v906
    %v915 = vadd.f32 %v895, %v907
    %v916 = vadd.f32 %v896, %v908
    %v917 = vadd.f32 %v897, %v909
    %v918 = vadd.f32 %v898, %v910
    %v919 = vlaneseq
    %v920 = vshrl.u32 %v919, 7
    %v921 = vsub.s32 2, %v920
    %v922 = vrot.slane %v41, %v921
    %v923 = vmul.f32 %v624, %v922
    %v924 = vmul.f32 %v626, %v922
    %v925 = vmul.f32 %v628, %v922
    %v926 = vmul.f32 %v630, %v922
    %v927 = vmul.f32 %v632, %v922
    %v928 = vmul.f32 %v634, %v922
    %v929 = vmul.f32 %v636, %v922
    %v930 = vmul.f32 %v638, %v922
    %v931 = vadd.f32 %v911, %v923
    %v932 = vadd.f32 %v912, %v924
    %v933 = vadd.f32 %v913, %v925
    %v934 = vadd.f32 %v914, %v926
    %v935 = vadd.f32 %v915, %v927
    %v936 = vadd.f32 %v916, %v928
    %v937 = vadd.f32 %v917, %v929
    %v938 = vadd.f32 %v918, %v930
    %v939 = vlaneseq
    %v940 = vshrl.u32 %v939, 7
    %v941 = vsub.s32 3, %v940
    %v942 = vrot.slane %v41, %v941
    %v943 = vmul.f32 %v648, %v942
    %v944 = vmul.f32 %v650, %v942
    %v945 = vmul.f32 %v652, %v942
    %v946 = vmul.f32 %v654, %v942
    %v947 = vmul.f32 %v656, %v942
    %v948 = vmul.f32 %v658, %v942
    %v949 = vmul.f32 %v660, %v942
    %v950 = vmul.f32 %v662, %v942
    %v951 = vadd.f32 %v931, %v943
    %v952 = vadd.f32 %v932, %v944
    %v953 = vadd.f32 %v933, %v945
    %v954 = vadd.f32 %v934, %v946
    %v955 = vadd.f32 %v935, %v947
    %v956 = vadd.f32 %v936, %v948
    %v957 = vadd.f32 %v937, %v949
    %v958 = vadd.f32 %v938, %v950
    %v960 = vcombine.high %v39, %v39
    %v962 = vunpack.c.l.s4 1966171168
    %v963 = vunpack.c.0.s8 %v962
    %v964 = vlaneseq
    %v965 = vshrl.u32 %v964, 7
    %v966 = vsub.s32 %v963, %v965
    %v967 = vrot.slane %v39, %v966
    %v969 = vunpack.c.l.s4 1966171168
    %v970 = vunpack.c.0.s8 %v969
    %v971 = vlaneseq
    %v972 = vshrl.u32 %v971, 7
    %v973 = vsub.s32 %v970, %v972
    %v974 = vrot.slane %v960, %v973
    %v975 = vcombine.high %v967, %v967
    %v976 = vcombine.high %v974, %v974
    %v978 = vunpack.c.l.s4 1966171168
    %v979 = vunpack.c.0.s8 %v978
    %v980 = vlaneseq
    %v981 = vshrl.u32 %v980, 7
    %v982 = vsub.s32 %v979, %v981
    %v983 = vrot.slane %v967, %v982
    %v985 = vunpack.c.l.s4 1966171168
    %v986 = vunpack.c.0.s8 %v985
    %v987 = vlaneseq
    %v988 = vshrl.u32 %v987, 7
    %v989 = vsub.s32 %v986, %v988
    %v990 = vrot.slane %v974, %v989
    %v992 = vunpack.c.l.s4 1966171168
    %v993 = vunpack.c.0.s8 %v992
    %v994 = vlaneseq
    %v995 = vshrl.u32 %v994, 7
    %v996 = vsub.s32 %v993, %v995
    %v997 = vrot.slane %v975, %v996
    %v999 = vunpack.c.l.s4 1966171168
    %v1000 = vunpack.c.0.s8 %v999
    %v1001 = vlaneseq
    %v1002 = vshrl.u32 %v1001, 7
    %v1003 = vsub.s32 %v1000, %v1002
    %v1004 = vrot.slane %v976, %v1003
    %v1005 = vcombine.high %v983, %v983
    %v1006 = vcombine.high %v990, %v990
    %v1007 = vcombine.high %v997, %v997
    %v1008 = vcombine.high %v1004, %v1004
    %v1017 = vmul.f32 %v879, %v983
    %v1018 = vmul.f32 %v880, %v997
    %v1019 = vmul.f32 %v881, %v1005
    %v1020 = vmul.f32 %v882, %v1007
    %v1021 = vmul.f32 %v883, %v990
    %v1022 = vmul.f32 %v884, %v1004
    %v1023 = vmul.f32 %v885, %v1006
    %v1024 = vmul.f32 %v886, %v1008
    %v1025 = vlaneseq
    %v1026 = vshrl.u32 %v1025, 7
    %v1027 = vsub.s32 0, %v1026
    %v1028 = vrot.slane %v1017, %v1027
    %v1029 = vlaneseq
    %v1030 = vshrl.u32 %v1029, 7
    %v1031 = vsub.s32 0, %v1030
    %v1032 = vrot.slane %v1018, %v1031
    %v1033 = vlaneseq
    %v1034 = vshrl.u32 %v1033, 7
    %v1035 = vsub.s32 0, %v1034
    %v1036 = vrot.slane %v1019, %v1035
    %v1037 = vlaneseq
    %v1038 = vshrl.u32 %v1037, 7
    %v1039 = vsub.s32 0, %v1038
    %v1040 = vrot.slane %v1020, %v1039
    %v1041 = vlaneseq
    %v1042 = vshrl.u32 %v1041, 7
    %v1043 = vsub.s32 0, %v1042
    %v1044 = vrot.slane %v1021, %v1043
    %v1045 = vlaneseq
    %v1046 = vshrl.u32 %v1045, 7
    %v1047 = vsub.s32 0, %v1046
    %v1048 = vrot.slane %v1022, %v1047
    %v1049 = vlaneseq
    %v1050 = vshrl.u32 %v1049, 7
    %v1051 = vsub.s32 0, %v1050
    %v1052 = vrot.slane %v1023, %v1051
    %v1053 = vlaneseq
    %v1054 = vshrl.u32 %v1053, 7
    %v1055 = vsub.s32 0, %v1054
    %v1056 = vrot.slane %v1024, %v1055
    %v1057 = vmul.f32 %v951, %v1028
    %v1058 = vmul.f32 %v952, %v1032
    %v1059 = vmul.f32 %v953, %v1036
    %v1060 = vmul.f32 %v954, %v1040
    %v1061 = vmul.f32 %v955, %v1044
    %v1062 = vmul.f32 %v956, %v1048
    %v1063 = vmul.f32 %v957, %v1052
    %v1064 = vmul.f32 %v958, %v1056
    %v1065 = vsel %vm178, %v1057, 0.0
    %1066 = vadd.xlane.f32.xlu0 %v1065
    %v1067 = vpop.xlane.xlu0 %1066
    %v1068 = vsel %vm178, %v1058, 0.0
    %1069 = vadd.xlane.f32.xlu0 %v1068
    %v1070 = vpop.xlane.xlu0 %1069
    %v1071 = vsel %vm178, %v1059, 0.0
    %1072 = vadd.xlane.f32.xlu0 %v1071
    %v1073 = vpop.xlane.xlu0 %1072
    %v1074 = vsel %vm178, %v1060, 0.0
    %1075 = vadd.xlane.f32.xlu0 %v1074
    %v1076 = vpop.xlane.xlu0 %1075
    %v1077 = vsel %vm178, %v1061, 0.0
    %1078 = vadd.xlane.f32.xlu0 %v1077
    %v1079 = vpop.xlane.xlu0 %1078
    %v1080 = vsel %vm178, %v1062, 0.0
    %1081 = vadd.xlane.f32.xlu0 %v1080
    %v1082 = vpop.xlane.xlu0 %1081
    %v1083 = vsel %vm178, %v1063, 0.0
    %1084 = vadd.xlane.f32.xlu0 %v1083
    %v1085 = vpop.xlane.xlu0 %1084
    %v1086 = vsel %vm178, %v1064, 0.0
    %1087 = vadd.xlane.f32.xlu0 %v1086
    %v1088 = vpop.xlane.xlu0 %1087
    %1097 = vrot.lane.b32.xlu0 %v1057, 96
    %v1098 = vpop.permute.xlu0 %1097
    %1099 = vrot.lane.b32.xlu0 %v1058, 96
    %v1100 = vpop.permute.xlu0 %1099
    %1101 = vrot.lane.b32.xlu0 %v1059, 96
    %v1102 = vpop.permute.xlu0 %1101
    %1103 = vrot.lane.b32.xlu0 %v1060, 96
    %v1104 = vpop.permute.xlu0 %1103
    %1105 = vrot.lane.b32.xlu0 %v1061, 96
    %v1106 = vpop.permute.xlu0 %1105
    %1107 = vrot.lane.b32.xlu0 %v1062, 96
    %v1108 = vpop.permute.xlu0 %1107
    %1109 = vrot.lane.b32.xlu0 %v1063, 96
    %v1110 = vpop.permute.xlu0 %1109
    %1111 = vrot.lane.b32.xlu0 %v1064, 96
    %v1112 = vpop.permute.xlu0 %1111
    %v1121 = vsel %vm178, %v1098, 0.0
    %1122 = vadd.xlane.f32.xlu0 %v1121
    %v1123 = vpop.xlane.xlu0 %1122
    %v1124 = vsel %vm178, %v1100, 0.0
    %1125 = vadd.xlane.f32.xlu0 %v1124
    %v1126 = vpop.xlane.xlu0 %1125
    %v1127 = vsel %vm178, %v1102, 0.0
    %1128 = vadd.xlane.f32.xlu0 %v1127
    %v1129 = vpop.xlane.xlu0 %1128
    %v1130 = vsel %vm178, %v1104, 0.0
    %1131 = vadd.xlane.f32.xlu0 %v1130
    %v1132 = vpop.xlane.xlu0 %1131
    %v1133 = vsel %vm178, %v1106, 0.0
    %1134 = vadd.xlane.f32.xlu0 %v1133
    %v1135 = vpop.xlane.xlu0 %1134
    %v1136 = vsel %vm178, %v1108, 0.0
    %1137 = vadd.xlane.f32.xlu0 %v1136
    %v1138 = vpop.xlane.xlu0 %1137
    %v1139 = vsel %vm178, %v1110, 0.0
    %1140 = vadd.xlane.f32.xlu0 %v1139
    %v1141 = vpop.xlane.xlu0 %1140
    %v1142 = vsel %vm178, %v1112, 0.0
    %1143 = vadd.xlane.f32.xlu0 %v1142
    %v1144 = vpop.xlane.xlu0 %1143
    %1145 = vrot.lane.b32.xlu0 %v1057, 64
    %v1146 = vpop.permute.xlu0 %1145
    %1147 = vrot.lane.b32.xlu0 %v1058, 64
    %v1148 = vpop.permute.xlu0 %1147
    %1149 = vrot.lane.b32.xlu0 %v1059, 64
    %v1150 = vpop.permute.xlu0 %1149
    %1151 = vrot.lane.b32.xlu0 %v1060, 64
    %v1152 = vpop.permute.xlu0 %1151
    %1153 = vrot.lane.b32.xlu0 %v1061, 64
    %v1154 = vpop.permute.xlu0 %1153
    %1155 = vrot.lane.b32.xlu0 %v1062, 64
    %v1156 = vpop.permute.xlu0 %1155
    %1157 = vrot.lane.b32.xlu0 %v1063, 64
    %v1158 = vpop.permute.xlu0 %1157
    %1159 = vrot.lane.b32.xlu0 %v1064, 64
    %v1160 = vpop.permute.xlu0 %1159
    %v1169 = vsel %vm178, %v1146, 0.0
    %1170 = vadd.xlane.f32.xlu0 %v1169
    %v1171 = vpop.xlane.xlu0 %1170
    %v1172 = vsel %vm178, %v1148, 0.0
    %1173 = vadd.xlane.f32.xlu0 %v1172
    %v1174 = vpop.xlane.xlu0 %1173
    %v1175 = vsel %vm178, %v1150, 0.0
    %1176 = vadd.xlane.f32.xlu0 %v1175
    %v1177 = vpop.xlane.xlu0 %1176
    %v1178 = vsel %vm178, %v1152, 0.0
    %1179 = vadd.xlane.f32.xlu0 %v1178
    %v1180 = vpop.xlane.xlu0 %1179
    %v1181 = vsel %vm178, %v1154, 0.0
    %1182 = vadd.xlane.f32.xlu0 %v1181
    %v1183 = vpop.xlane.xlu0 %1182
    %v1184 = vsel %vm178, %v1156, 0.0
    %1185 = vadd.xlane.f32.xlu0 %v1184
    %v1186 = vpop.xlane.xlu0 %1185
    %v1187 = vsel %vm178, %v1158, 0.0
    %1188 = vadd.xlane.f32.xlu0 %v1187
    %v1189 = vpop.xlane.xlu0 %1188
    %v1190 = vsel %vm178, %v1160, 0.0
    %1191 = vadd.xlane.f32.xlu0 %v1190
    %v1192 = vpop.xlane.xlu0 %1191
    %1193 = vrot.lane.b32.xlu0 %v1057, 32
    %v1194 = vpop.permute.xlu0 %1193
    %1195 = vrot.lane.b32.xlu0 %v1058, 32
    %v1196 = vpop.permute.xlu0 %1195
    %1197 = vrot.lane.b32.xlu0 %v1059, 32
    %v1198 = vpop.permute.xlu0 %1197
    %1199 = vrot.lane.b32.xlu0 %v1060, 32
    %v1200 = vpop.permute.xlu0 %1199
    %1201 = vrot.lane.b32.xlu0 %v1061, 32
    %v1202 = vpop.permute.xlu0 %1201
    %1203 = vrot.lane.b32.xlu0 %v1062, 32
    %v1204 = vpop.permute.xlu0 %1203
    %1205 = vrot.lane.b32.xlu0 %v1063, 32
    %v1206 = vpop.permute.xlu0 %1205
    %1207 = vrot.lane.b32.xlu0 %v1064, 32
    %v1208 = vpop.permute.xlu0 %1207
    %v1217 = vsel %vm178, %v1194, 0.0
    %1218 = vadd.xlane.f32.xlu0 %v1217
    %v1219 = vpop.xlane.xlu0 %1218
    %v1220 = vsel %vm178, %v1196, 0.0
    %1221 = vadd.xlane.f32.xlu0 %v1220
    %v1222 = vpop.xlane.xlu0 %1221
    %v1223 = vsel %vm178, %v1198, 0.0
    %1224 = vadd.xlane.f32.xlu0 %v1223
    %v1225 = vpop.xlane.xlu0 %1224
    %v1226 = vsel %vm178, %v1200, 0.0
    %1227 = vadd.xlane.f32.xlu0 %v1226
    %v1228 = vpop.xlane.xlu0 %1227
    %v1229 = vsel %vm178, %v1202, 0.0
    %1230 = vadd.xlane.f32.xlu0 %v1229
    %v1231 = vpop.xlane.xlu0 %1230
    %v1232 = vsel %vm178, %v1204, 0.0
    %1233 = vadd.xlane.f32.xlu0 %v1232
    %v1234 = vpop.xlane.xlu0 %1233
    %v1235 = vsel %vm178, %v1206, 0.0
    %1236 = vadd.xlane.f32.xlu0 %v1235
    %v1237 = vpop.xlane.xlu0 %1236
    %v1238 = vsel %vm178, %v1208, 0.0
    %1239 = vadd.xlane.f32.xlu0 %v1238
    %v1240 = vpop.xlane.xlu0 %1239
    %v1249 = vlaneseq
    %v1250 = vand.u32 %v1249, 127
    %v1251 = vlaneseq
    %v1252 = vshrl.u32 %v1251, 7
    %v1253 = vsub.s32 %v1250, %v1252
    %v1254 = vrot.slane %v1067, %v1253
    %v1255 = vlaneseq
    %v1256 = vshrl.u32 %v1255, 7
    %v1257 = vsub.s32 %v1250, %v1256
    %v1258 = vrot.slane %v1070, %v1257
    %v1259 = vlaneseq
    %v1260 = vshrl.u32 %v1259, 7
    %v1261 = vsub.s32 %v1250, %v1260
    %v1262 = vrot.slane %v1073, %v1261
    %v1263 = vlaneseq
    %v1264 = vshrl.u32 %v1263, 7
    %v1265 = vsub.s32 %v1250, %v1264
    %v1266 = vrot.slane %v1076, %v1265
    %v1267 = vlaneseq
    %v1268 = vshrl.u32 %v1267, 7
    %v1269 = vsub.s32 %v1250, %v1268
    %v1270 = vrot.slane %v1079, %v1269
    %v1271 = vlaneseq
    %v1272 = vshrl.u32 %v1271, 7
    %v1273 = vsub.s32 %v1250, %v1272
    %v1274 = vrot.slane %v1082, %v1273
    %v1275 = vlaneseq
    %v1276 = vshrl.u32 %v1275, 7
    %v1277 = vsub.s32 %v1250, %v1276
    %v1278 = vrot.slane %v1085, %v1277
    %v1279 = vlaneseq
    %v1280 = vshrl.u32 %v1279, 7
    %v1281 = vsub.s32 %v1250, %v1280
    %v1282 = vrot.slane %v1088, %v1281
    %vm1283 = vcmask 1041409
    %v1284 = vsel %vm1283, %v1258, %v1254
    %vm1285 = vcmask 1042434
    %v1286 = vsel %vm1285, %v1262, %v1284
    %vm1287 = vcmask 1043459
    %v1288 = vsel %vm1287, %v1266, %v1286
    %vm1289 = vcmask 1044484
    %v1290 = vsel %vm1289, %v1270, %v1288
    %vm1291 = vcmask 1045509
    %v1292 = vsel %vm1291, %v1274, %v1290
    %vm1293 = vcmask 1046534
    %v1294 = vsel %vm1293, %v1278, %v1292
    %vm1295 = vcmask 1047559
    %v1296 = vsel %vm1295, %v1282, %v1294
    %v1306 = vadd.s32 %v1250, 4294967288
    %v1307 = vlaneseq
    %v1308 = vshrl.u32 %v1307, 7
    %v1309 = vsub.s32 %v1306, %v1308
    %v1310 = vrot.slane %v1123, %v1309
    %v1311 = vlaneseq
    %v1312 = vshrl.u32 %v1311, 7
    %v1313 = vsub.s32 %v1306, %v1312
    %v1314 = vrot.slane %v1126, %v1313
    %v1315 = vlaneseq
    %v1316 = vshrl.u32 %v1315, 7
    %v1317 = vsub.s32 %v1306, %v1316
    %v1318 = vrot.slane %v1129, %v1317
    %v1319 = vlaneseq
    %v1320 = vshrl.u32 %v1319, 7
    %v1321 = vsub.s32 %v1306, %v1320
    %v1322 = vrot.slane %v1132, %v1321
    %v1323 = vlaneseq
    %v1324 = vshrl.u32 %v1323, 7
    %v1325 = vsub.s32 %v1306, %v1324
    %v1326 = vrot.slane %v1135, %v1325
    %v1327 = vlaneseq
    %v1328 = vshrl.u32 %v1327, 7
    %v1329 = vsub.s32 %v1306, %v1328
    %v1330 = vrot.slane %v1138, %v1329
    %v1331 = vlaneseq
    %v1332 = vshrl.u32 %v1331, 7
    %v1333 = vsub.s32 %v1306, %v1332
    %v1334 = vrot.slane %v1141, %v1333
    %v1335 = vlaneseq
    %v1336 = vshrl.u32 %v1335, 7
    %v1337 = vsub.s32 %v1306, %v1336
    %v1338 = vrot.slane %v1144, %v1337
    %v1339 = vsel %vm1283, %v1314, %v1310
    %v1340 = vsel %vm1285, %v1318, %v1339
    %v1341 = vsel %vm1287, %v1322, %v1340
    %v1342 = vsel %vm1289, %v1326, %v1341
    %v1343 = vsel %vm1291, %v1330, %v1342
    %v1344 = vsel %vm1293, %v1334, %v1343
    %v1345 = vsel %vm1295, %v1338, %v1344
    %v1355 = vadd.s32 %v1250, 4294967280
    %v1356 = vlaneseq
    %v1357 = vshrl.u32 %v1356, 7
    %v1358 = vsub.s32 %v1355, %v1357
    %v1359 = vrot.slane %v1171, %v1358
    %v1360 = vlaneseq
    %v1361 = vshrl.u32 %v1360, 7
    %v1362 = vsub.s32 %v1355, %v1361
    %v1363 = vrot.slane %v1174, %v1362
    %v1364 = vlaneseq
    %v1365 = vshrl.u32 %v1364, 7
    %v1366 = vsub.s32 %v1355, %v1365
    %v1367 = vrot.slane %v1177, %v1366
    %v1368 = vlaneseq
    %v1369 = vshrl.u32 %v1368, 7
    %v1370 = vsub.s32 %v1355, %v1369
    %v1371 = vrot.slane %v1180, %v1370
    %v1372 = vlaneseq
    %v1373 = vshrl.u32 %v1372, 7
    %v1374 = vsub.s32 %v1355, %v1373
    %v1375 = vrot.slane %v1183, %v1374
    %v1376 = vlaneseq
    %v1377 = vshrl.u32 %v1376, 7
    %v1378 = vsub.s32 %v1355, %v1377
    %v1379 = vrot.slane %v1186, %v1378
    %v1380 = vlaneseq
    %v1381 = vshrl.u32 %v1380, 7
    %v1382 = vsub.s32 %v1355, %v1381
    %v1383 = vrot.slane %v1189, %v1382
    %v1384 = vlaneseq
    %v1385 = vshrl.u32 %v1384, 7
    %v1386 = vsub.s32 %v1355, %v1385
    %v1387 = vrot.slane %v1192, %v1386
    %v1388 = vsel %vm1283, %v1363, %v1359
    %v1389 = vsel %vm1285, %v1367, %v1388
    %v1390 = vsel %vm1287, %v1371, %v1389
    %v1391 = vsel %vm1289, %v1375, %v1390
    %v1392 = vsel %vm1291, %v1379, %v1391
    %v1393 = vsel %vm1293, %v1383, %v1392
    %v1394 = vsel %vm1295, %v1387, %v1393
    %v1404 = vadd.s32 %v1250, 4294967272
    %v1405 = vlaneseq
    %v1406 = vshrl.u32 %v1405, 7
    %v1407 = vsub.s32 %v1404, %v1406
    %v1408 = vrot.slane %v1219, %v1407
    %v1409 = vlaneseq
    %v1410 = vshrl.u32 %v1409, 7
    %v1411 = vsub.s32 %v1404, %v1410
    %v1412 = vrot.slane %v1222, %v1411
    %v1413 = vlaneseq
    %v1414 = vshrl.u32 %v1413, 7
    %v1415 = vsub.s32 %v1404, %v1414
    %v1416 = vrot.slane %v1225, %v1415
    %v1417 = vlaneseq
    %v1418 = vshrl.u32 %v1417, 7
    %v1419 = vsub.s32 %v1404, %v1418
    %v1420 = vrot.slane %v1228, %v1419
    %v1421 = vlaneseq
    %v1422 = vshrl.u32 %v1421, 7
    %v1423 = vsub.s32 %v1404, %v1422
    %v1424 = vrot.slane %v1231, %v1423
    %v1425 = vlaneseq
    %v1426 = vshrl.u32 %v1425, 7
    %v1427 = vsub.s32 %v1404, %v1426
    %v1428 = vrot.slane %v1234, %v1427
    %v1429 = vlaneseq
    %v1430 = vshrl.u32 %v1429, 7
    %v1431 = vsub.s32 %v1404, %v1430
    %v1432 = vrot.slane %v1237, %v1431
    %v1433 = vlaneseq
    %v1434 = vshrl.u32 %v1433, 7
    %v1435 = vsub.s32 %v1404, %v1434
    %v1436 = vrot.slane %v1240, %v1435
    %v1437 = vsel %vm1283, %v1412, %v1408
    %v1438 = vsel %vm1285, %v1416, %v1437
    %v1439 = vsel %vm1287, %v1420, %v1438
    %v1440 = vsel %vm1289, %v1424, %v1439
    %v1441 = vsel %vm1291, %v1428, %v1440
    %v1442 = vsel %vm1293, %v1432, %v1441
    %v1443 = vsel %vm1295, %v1436, %v1442
    %vm1445 = vcmask 64512
    %v1446 = vsel %vm1445, %v1296, %v1345
    %vm1447 = vcmask 130048
    %v1448 = vsel %vm1447, %v1446, %v1394
    %vm1449 = vcmask 195584
    %v1450 = vsel %vm1449, %v1448, %v1443
    %v1451 = vld [vmem:[%s0] sm:$0xff]
    %v1452 = vadd.f32 %v1451, %v1450
    %v1453 = vsel %vm178, %v1452, 0.0
    %1454 = vadd.xlane.f32.xlu0 %v1453
    %v1455 = vpop.xlane.xlu0 %1454
    %v1456 = vrcp.pop 32.0
    %v1457 = vmul.f32 %v1455, %v1456
    %v1458 = vsub.f32 %v1452, %v1457
    %v1459 = vmul.f32 %v1458, %v1458
    %v1460 = vsel %vm178, %v1459, 0.0
    %1461 = vadd.xlane.f32.xlu0 %v1460
    %v1462 = vpop.xlane.xlu0 %1461
    %v1463 = vmul.f32 %v1462, %v1456
    %v1464 = vadd.f32 %v1463, 1e-05
    %v1465 = vrsqrt.pop %v1464
    %v1466 = vmul.f32 %v1458, %v1465
    %v1467 = vld [vmem:[%s6] sm:$0x1]
    %v1469 = vlaneseq
    %v1470 = vshrl.u32 %v1469, 7
    %v1471 = vsub.s32 0, %v1470
    %v1472 = vrot.slane %v1467, %v1471
    %v1474 = vmul.f32 %v1466, %v1472
    %v1475 = vld [vmem:[%s7] sm:$0x1]
    %v1477 = vlaneseq
    %v1478 = vshrl.u32 %v1477, 7
    %v1479 = vsub.s32 0, %v1478
    %v1480 = vrot.slane %v1475, %v1479
    %v1482 = vadd.f32 %v1474, %v1480
    %1483 = vst.msk [vmem:[#allocation2] sm:$0xff] %vm178, %v1482
    // Predicated region
    $region34: #{tpu_custom_call.1} parent=1 // pred_check
      _
    $region35: #{tpu_custom_call.1} parent=1 // pred_check_branch
      %1485 = sbr.rel (0) target = $region37
    $region36: #{tpu_custom_call.1} parent=1 // pred_region
      %s1487 = ssub.s32 128, 128
      %1488 = vsyncadd [#allocation3], %s1487
      %s1490 = sshll.u32 [#allocation2], 4
      %s1491 = int_to_ptr.vmem [resolvable:$true] %s1490
      %1493 = dma.vmem_to_hbm [thread:$0]  %s1491, 128, %s8, [#allocation3]
    $region37: #{tpu_custom_call.1} parent=1 // pred_fallthru
      _
    // Predicated region
    $region38: #{tpu_custom_call.1} parent=1 // pred_check
      _
    $region39: #{tpu_custom_call.1} parent=1 // pred_check_branch
      %1495 = sbr.rel (0) target = $region41
    $region40: #{tpu_custom_call.1} parent=1 // pred_region
      %1496 = dma.done [#allocation3], 128
    $region41: #{tpu_custom_call.1} parent=1 // pred_fallthru
      _
    %1497 = vsyncpa [#allocation3], 1

</llo_original>
